<compile_context>
chip_gen: v6e
topology: v6e:2x2x1
jax: 0.10.0
libtpu: 0.0.40
codegen_flags: <defaults>
</compile_context>

<pallas_src>
import jax
import jax.numpy as jnp
from jax.experimental import pallas as pl
from jax.experimental.pallas import tpu as pltpu

HIDDEN = 512   # Conv1 output channels (fixed by the module)
N_OUT = 2      # Conv2 output channels (fixed by the module)


def _image_da_kernel(x_ref, w1_ref, b1_ref, w2_ref, b2_ref, out_ref):
    # grad_reverse is identity in the forward pass.
    x = x_ref[...]                                           # (TM, C) bf16

    # Conv1 (1x1) == per-pixel matmul over channels, + bias + ReLU.
    # bf16 operands, f32 accumulation on the MXU.
    h1 = jnp.dot(x, w1_ref[...], preferred_element_type=jnp.float32)
    h1 = jnp.maximum(h1 + b1_ref[...], 0.0)                  # (TM, 512) f32

    # Conv2 (1x1), only 2 output channels: run on the VPU/XLU instead of an
    # MXU matmul that would use 2 of 128/256 output columns; this keeps the
    # MXU exclusively on Conv1 and hides Conv2 in its shadow.
    w2 = w2_ref[...]                                         # (2, 512) f32
    z0 = jnp.sum(h1 * w2[0:1, :], axis=-1, keepdims=True) + b2_ref[0]
    z1 = jnp.sum(h1 * w2[1:2, :], axis=-1, keepdims=True) + b2_ref[1]
    out_ref[...] = jnp.concatenate([z0, z1], axis=-1)        # (TM, 2) f32


def image_da_forward(x_nchw, params, *, tm=512):
    """x_nchw: (N, C, H, W) float32.  Returns (N, 2, H, W) float32 logits."""
    n, c, h, w = x_nchw.shape
    m = n * h * w

    # NCHW -> (M, C): channels on the lane axis (layout plumbing in plain JAX).
    x2d = jnp.transpose(x_nchw, (0, 2, 3, 1)).reshape(m, c).astype(jnp.bfloat16)

    # Don't use a tile larger than the problem (keeps small inputs pad-free).
    tm = min(tm, max(8, (m + 7) // 8 * 8))
    grid_m = pl.cdiv(m, tm)
    m_pad = grid_m * tm
    if m_pad != m:
        x2d = jnp.pad(x2d, ((0, m_pad - m), (0, 0)))

    w1 = params["w1"]
    b1 = params["b1"]
    w2 = params["w2"]
    b2 = params["b2"]

    cost = pl.CostEstimate(
        flops=2 * m_pad * c * HIDDEN + 2 * m_pad * HIDDEN * N_OUT,
        transcendentals=0,
        bytes_accessed=(x2d.size * 2 + w1.size * 2 + b1.size * 4
                        + w2.size * 4 + b2.size * 4 + m_pad * N_OUT * 4),
    )

    out = pl.pallas_call(
        _image_da_kernel,
        out_shape=jax.ShapeDtypeStruct((m_pad, N_OUT), jnp.float32),
        grid_spec=pltpu.PrefetchScalarGridSpec(
            num_scalar_prefetch=0,
            grid=(grid_m,),
            in_specs=[
                # x: pipelined (TM, C) tiles over the pixel axis.
                pl.BlockSpec((tm, c), lambda i: (i, 0)),
                # Weights / biases: constant index_map -> resident in VMEM.
                pl.BlockSpec((c, HIDDEN), lambda i: (0, 0)),
                pl.BlockSpec((1, HIDDEN), lambda i: (0, 0)),
                pl.BlockSpec((N_OUT, HIDDEN), lambda i: (0, 0)),
                # b2: two scalars -> SMEM.
                pl.BlockSpec(memory_space=pltpu.MemorySpace.SMEM),
            ],
            out_specs=pl.BlockSpec((tm, N_OUT), lambda i: (i, 0)),
        ),
        compiler_params=pltpu.CompilerParams(
            dimension_semantics=("parallel",),
        ),
        cost_estimate=cost,
    )(x2d, w1, b1, w2, b2)

    out = out[:m].reshape(n, h, w, N_OUT)
    return jnp.transpose(out, (0, 3, 1, 2))                  # (N, 2, H, W)


def image_label_resize(x_out, need_backprop):
    # TODO(synk): ImageLabelResizeLayer was not among the provided dependent
    # classes; this mirrors the DA-Faster repo behaviour: each image's scalar
    # domain label is nearest-resized (i.e. broadcast) to the feature map's
    # (H, W) and returned as integer labels of shape (N, H, W).
    _, _, h, w = x_out.shape
    lbl = need_backprop.astype(jnp.int32).reshape(-1, 1, 1)
    return jnp.broadcast_to(lbl, (need_backprop.shape[0], h, w))


def init_params(key, dim, hidden=HIDDEN):
    k1, k2 = jax.random.split(key)
    s = 0.02
    return {
        # Conv1: PyTorch weight (512, dim, 1, 1) stored transposed as (dim, 512).
        "w1": (jax.random.normal(k1, (dim, hidden), jnp.float32) * s
               ).astype(jnp.bfloat16),
        "b1": jnp.zeros((1, hidden), jnp.float32),
        # Conv2: PyTorch weight (2, 512, 1, 1) stored as rows (2, 512).
        "w2": jax.random.normal(k2, (N_OUT, hidden), jnp.float32) * s,
        "b2": jnp.zeros((N_OUT,), jnp.float32),
    }


def _reference_forward(x_nchw, params):
    """Plain-JAX reference with the same dtype path (bf16 in, f32 accum)."""
    n, c, h, w = x_nchw.shape
    x2d = jnp.transpose(x_nchw, (0, 2, 3, 1)).reshape(-1, c).astype(jnp.bfloat16)
    h1 = jnp.dot(x2d, params["w1"], preferred_element_type=jnp.float32)
    h1 = jnp.maximum(h1 + params["b1"], 0.0)
    z = jnp.dot(h1, params["w2"].T) + params["b2"][None, :]
    return jnp.transpose(z.reshape(n, h, w, N_OUT), (0, 3, 1, 2))


if __name__ == "__main__":
    # Small shapes consistent with the module: batch=2, dim=128 backbone
    # channels, 16x16 feature map -> M = 512 pixel rows, grid of 2 tiles.
    N, C, H, W = 2, 128, 16, 16

    key = jax.random.PRNGKey(0)
    kx, kp = jax.random.split(key)
    x = jax.random.normal(kx, (N, C, H, W), jnp.float32)
    need_backprop = jnp.array([0.0, 1.0], jnp.float32)   # per-image domain label

    params = init_params(kp, C)

    logits = image_da_forward(x, params, tm=256)
    label = image_label_resize(logits, need_backprop)
    jax.block_until_ready((logits, label))

    assert logits.shape == (N, N_OUT, H, W)
    assert label.shape == (N, H, W)

    ref = _reference_forward(x, params)
    assert jnp.allclose(logits, ref, atol=1e-2, rtol=1e-2), "mismatch vs reference"

    print("KERNEL_OK")
</pallas_src>

<mosaic_0001>
module attributes {stable_mosaic.version = 11 : i64} {
  func.func @_image_da_kernel(%arg0: i32, %arg1: memref<256x128xbf16, #tpu.memory_space<vmem>>, %arg2: memref<128x512xbf16, #tpu.memory_space<vmem>>, %arg3: memref<1x512xf32, #tpu.memory_space<vmem>>, %arg4: memref<2x512xf32, #tpu.memory_space<vmem>>, %arg5: memref<2xf32, #tpu.memory_space<smem>>, %arg6: memref<256x2xf32, #tpu.memory_space<vmem>>) attributes {dimension_semantics = [#tpu.dimension_semantics<parallel>], iteration_bounds = array<i64: 2>, scalar_prefetch = 0 : i64, scratch_operands = 0 : i64, tpu.core_type = #tpu.core_type<tc>, window_params = [{transform_indices = @transform_0, window_bounds = array<i64: 256, 128>}, {pipeline_mode = #tpu.pipeline_mode<synchronous>, transform_indices = @transform_1, window_bounds = array<i64: 128, 512>}, {pipeline_mode = #tpu.pipeline_mode<synchronous>, transform_indices = @transform_2, window_bounds = array<i64: 1, 512>}, {pipeline_mode = #tpu.pipeline_mode<synchronous>, transform_indices = @transform_3, window_bounds = array<i64: 2, 512>}, {transform_indices = @transform_4, window_bounds = array<i64: 2>}, {transform_indices = @transform_5, window_bounds = array<i64: 256, 2>}]} {
    %c0 = arith.constant 0 : index
    %c0_0 = arith.constant 0 : index
    %0 = vector.load %arg1[%c0, %c0_0] : memref<256x128xbf16, #tpu.memory_space<vmem>>, vector<256x128xbf16>
    %c0_1 = arith.constant 0 : index
    %c0_2 = arith.constant 0 : index
    %1 = vector.load %arg2[%c0_1, %c0_2] : memref<128x512xbf16, #tpu.memory_space<vmem>>, vector<128x512xbf16>
    %cst = arith.constant dense<0.000000e+00> : vector<256x512xf32>
    %2 = tpu.matmul %0, %1, %cst {dimension_numbers = #tpu.dot_dimension_numbers<[1], [0], [0], [1], [0, 0, 1, 1], [], []>} : vector<256x128xbf16>, vector<128x512xbf16>, vector<256x512xf32> -> vector<256x512xf32>
    %c0_3 = arith.constant 0 : index
    %c0_4 = arith.constant 0 : index
    %3 = vector.load %arg3[%c0_3, %c0_4] : memref<1x512xf32, #tpu.memory_space<vmem>>, vector<1x512xf32>
    %4 = vector.broadcast %3 : vector<1x512xf32> to vector<256x512xf32>
    %5 = arith.addf %2, %4 : vector<256x512xf32>
    %cst_5 = arith.constant 0.000000e+00 : f32
    %6 = vector.broadcast %cst_5 : f32 to vector<256x512xf32>
    %7 = arith.maximumf %5, %6 : vector<256x512xf32>
    %c0_6 = arith.constant 0 : index
    %c0_7 = arith.constant 0 : index
    %8 = vector.load %arg4[%c0_6, %c0_7] : memref<2x512xf32, #tpu.memory_space<vmem>>, vector<2x512xf32>
    %9 = vector.extract_strided_slice %8 {offsets = [0, 0], sizes = [1, 512], strides = [1, 1]} : vector<2x512xf32> to vector<1x512xf32>
    %10 = vector.broadcast %9 : vector<1x512xf32> to vector<256x512xf32>
    %11 = arith.mulf %7, %10 : vector<256x512xf32>
    %cst_8 = arith.constant dense<0.000000e+00> : vector<256xf32>
    %12 = vector.multi_reduction <add>, %11, %cst_8 [1] : vector<256x512xf32> to vector<256xf32>
    %13 = vector.shape_cast %12 : vector<256xf32> to vector<256x1xf32>
    %c0_9 = arith.constant 0 : index
    %14 = memref.load %arg5[%c0_9] : memref<2xf32, #tpu.memory_space<smem>>
    %15 = vector.broadcast %14 : f32 to vector<256x1xf32>
    %16 = arith.addf %13, %15 : vector<256x1xf32>
    %17 = vector.extract_strided_slice %8 {offsets = [1, 0], sizes = [1, 512], strides = [1, 1]} : vector<2x512xf32> to vector<1x512xf32>
    %18 = vector.broadcast %17 : vector<1x512xf32> to vector<256x512xf32>
    %19 = arith.mulf %7, %18 : vector<256x512xf32>
    %cst_10 = arith.constant dense<0.000000e+00> : vector<256xf32>
    %20 = vector.multi_reduction <add>, %19, %cst_10 [1] : vector<256x512xf32> to vector<256xf32>
    %21 = vector.shape_cast %20 : vector<256xf32> to vector<256x1xf32>
    %c1 = arith.constant 1 : index
    %22 = memref.load %arg5[%c1] : memref<2xf32, #tpu.memory_space<smem>>
    %23 = vector.broadcast %22 : f32 to vector<256x1xf32>
    %24 = arith.addf %21, %23 : vector<256x1xf32>
    %25 = tpu.concatenate %16, %24 in 1 : vector<256x1xf32>, vector<256x1xf32> -> vector<256x2xf32>
    %c0_11 = arith.constant 0 : index
    %c0_12 = arith.constant 0 : index
    %26 = vector.load %arg6[%c0_11, %c0_12] : memref<256x2xf32, #tpu.memory_space<vmem>>, vector<256x2xf32>
    tpu.vector_store %arg6[%c0_11, %c0_12], %25 {strides = array<i32>} : memref<256x2xf32, #tpu.memory_space<vmem>>, vector<256x2xf32>,
    return
  }
  func.func @transform_0(%arg0: i32) -> (i32, i32) {
    %c0_i32 = arith.constant 0 : i32
    %c0_i32_0 = arith.constant 0 : i32
    return %arg0, %c0_i32 : i32, i32
  }
  func.func @transform_1(%arg0: i32) -> (i32, i32) {
    %c0_i32 = arith.constant 0 : i32
    %c0_i32_0 = arith.constant 0 : i32
    %c0_i32_1 = arith.constant 0 : i32
    return %c0_i32, %c0_i32_0 : i32, i32
  }
  func.func @transform_2(%arg0: i32) -> (i32, i32) {
    %c0_i32 = arith.constant 0 : i32
    %c0_i32_0 = arith.constant 0 : i32
    %c0_i32_1 = arith.constant 0 : i32
    return %c0_i32, %c0_i32_0 : i32, i32
  }
  func.func @transform_3(%arg0: i32) -> (i32, i32) {
    %c0_i32 = arith.constant 0 : i32
    %c0_i32_0 = arith.constant 0 : i32
    %c0_i32_1 = arith.constant 0 : i32
    return %c0_i32, %c0_i32_0 : i32, i32
  }
  func.func @transform_4(%arg0: i32) -> i32 {
    %c0_i32 = arith.constant 0 : i32
    %c0_i32_0 = arith.constant 0 : i32
    return %c0_i32 : i32
  }
  func.func @transform_5(%arg0: i32) -> (i32, i32) {
    %c0_i32 = arith.constant 0 : i32
    %c0_i32_0 = arith.constant 0 : i32
    return %arg0, %c0_i32 : i32, i32
  }
}

</mosaic_0001>

<llo_original>
// kernel: tpu_custom_call.1
$region0: #{tpu_custom_call.1}
  #allocation0 [shape = 'u32[]', space=smem, size = 0x4, offset = 0x4, fixed_abs, tag = 'smem constant byte address 0x4 - core index']
  #allocation1 [shape = 'u32[144,128]{1,0:T(1,128)}', space=vmem, size = 0x12000, scoped, tag = 'internal scratch']
  %s0 = inlined_call_operand.hbm [shape: bf16[512,128], index: 0, kind: input, shape index: {}]
  %s1 = inlined_call_operand.hbm [shape: bf16[128,512], index: 1, kind: input, shape index: {}]
  %s2 = inlined_call_operand.hbm [shape: f32[1,512], index: 2, kind: input, shape index: {}]
  %s3 = inlined_call_operand.hbm [shape: f32[2,512], index: 3, kind: input, shape index: {}]
  %s4 = inlined_call_operand.vmem [shape: f32[2], index: 4, kind: input, shape index: {}]
  %s5 = inlined_call_operand.vmem [shape: f32[512,2], index: 5, kind: output, shape index: {}]
  %s6 = sld [smem:[#allocation0]]
  $region73: #{tpu_custom_call.1} parent=0
    _
  %s8 = ssub.s32 1, %s6
  %s9 = scalar_select 0, %s8, %s6
  $region1: #{tpu_custom_call.1} parent=0
    #allocation2 [shape = 'u8[131072]{0}', space=vmem, size = 0x20000, scoped, tag = 'input window, operand 0']
    #allocation3 [shape = 's32[2]{0}', space=sflag, size = 0x8, scoped, tag = 'scoped memory for tpu_custom_call.1']
    #allocation4 [shape = 's32[2]{0}', space=sflag, size = 0x8, scoped, tag = 'scoped memory for tpu_custom_call.1']
    #allocation5 [shape = 'u8[131072]{0}', space=vmem, size = 0x20000, scoped, tag = 'input window, operand 1, single buffered']
    #allocation6 [shape = 's32[1]{0}', space=sflag, size = 0x4, scoped, tag = 'scoped memory for tpu_custom_call.1']
    #allocation7 [shape = 'u8[2048]{0}', space=vmem, size = 0x800, scoped, tag = 'input window, operand 2, single buffered']
    #allocation8 [shape = 'u8[4096]{0}', space=vmem, size = 0x1000, scoped, tag = 'input window, operand 3, single buffered']
    #allocation9 [shape = 's32[1]{0}', space=sflag, size = 0x4, scoped, tag = 'scoped memory for tpu_custom_call.1']
    #allocation10 [shape = 'u8[512]{0}', space=smem, size = 0x200, scoped, tag = 'input window, operand 4, single buffered']
    %10 = vsyncpa [#allocation3], 0
    %s11 = scalar_lea.sflag [#allocation3], 1
    %12 = vsyncpa %s11, 0
    %13 = vsyncpa [#allocation6], 0
    %14 = vsyncpa [#allocation9], 0
    %15 = vsyncpa [#allocation4], 0
    loop: start=0, step=1, limit=4
    $region2: #{tpu_custom_call.1} parent=1 // loop_pre_header
      _
    $region3: #{tpu_custom_call.1} parent=1 // loop_header
      %s17 = sphi 0, %s21
      %p18 = scmp.ge.s32.totalorder %s17, 4
      %s27 = sphi 0, %s29
      %s30 = sphi 0, %s27
      %s31 = sphi 0, %s30
      %s47 = sphi 0, %s31
      %s51 = sphi 0, %s51
      %s53 = sphi 0, %s51
      %s54 = sphi 0, %s53
      %s68 = sphi 0, %s54
      %s72 = sphi 0, %s72
      %s74 = sphi 0, %s72
      %s75 = sphi 0, %s74
      %s89 = sphi 0, %s75
      %s93 = sphi 0, %s93
      %s95 = sphi 0, %s93
      %s96 = sphi 0, %s95
      %s110 = sphi 0, %s96
      %s114 = sphi 0, %s114
      %s116 = sphi 0, %s114
      %s117 = sphi 0, %s116
      %s131 = sphi 0, %s117
      %s137 = sphi 0, %s139
      %s140 = sphi 0, %s137
      %s141 = sphi 0, %s140
      %s157 = sphi 0, %s141
    $region4: #{tpu_custom_call.1} parent=1 // loop_header_branch
      %20 = sbr.rel (%p18) target = $region8
    $region5: #{tpu_custom_call.1} parent=1 // loop_body
      %s22 = ssub.s32 %s17, 1
      %s23 = ssub.s32 %s17, 2
      %s24 = sadd.s32 %s17, 1
      %s25 = ssub.s32 %s17, %s24
      %p26 = scmp.eq.s32.totalorder %s25, 0
      %s28 = sadd.s32 %s27, 1
      %s29 = scalar_select %p26, %s27, %s28
      %p32 = pneg %p26
      %p33 = scmp.eq.s32.totalorder %s17, 1
      %p34 = por %p32, %p33
      %p35 = scmp.ne.s32.totalorder %s27, %s30
      %p36 = scmp.eq.s32.totalorder %s17, 0
      %p37 = por %p35, %p36
      %p38 = scmp.ne.s32.totalorder %s27, %s30
      %p39 = scmp.eq.s32.totalorder %s22, 1
      %p40 = por %p38, %p39
      %p41 = scmp.ne.s32.totalorder %s30, %s31
      %p42 = scmp.eq.s32.totalorder %s22, 0
      %p43 = por %p41, %p42
      %p44 = scmp.ne.s32.totalorder %s30, %s31
      %p45 = scmp.eq.s32.totalorder %s23, 1
      %p46 = por %p44, %p45
      %p48 = scmp.ne.s32.totalorder %s31, %s47
      %p49 = scmp.eq.s32.totalorder %s23, 0
      %p50 = por %p48, %p49
      %s52 = sadd.s32 %s51, 1
      %p55 = scmp.eq.s32.totalorder %s17, 1
      %p56 = scmp.ne.s32.totalorder %s51, %s53
      %p57 = scmp.eq.s32.totalorder %s17, 0
      %p58 = por %p56, %p57
      %p59 = scmp.ne.s32.totalorder %s51, %s53
      %p60 = scmp.eq.s32.totalorder %s22, 1
      %p61 = por %p59, %p60
      %p62 = scmp.ne.s32.totalorder %s53, %s54
      %p63 = scmp.eq.s32.totalorder %s22, 0
      %p64 = por %p62, %p63
      %p65 = scmp.ne.s32.totalorder %s53, %s54
      %p66 = scmp.eq.s32.totalorder %s23, 1
      %p67 = por %p65, %p66
      %p69 = scmp.ne.s32.totalorder %s54, %s68
      %p70 = scmp.eq.s32.totalorder %s23, 0
      %p71 = por %p69, %p70
      %s73 = sadd.s32 %s72, 1
      %p76 = scmp.eq.s32.totalorder %s17, 1
      %p77 = scmp.ne.s32.totalorder %s72, %s74
      %p78 = scmp.eq.s32.totalorder %s17, 0
      %p79 = por %p77, %p78
      %p80 = scmp.ne.s32.totalorder %s72, %s74
      %p81 = scmp.eq.s32.totalorder %s22, 1
      %p82 = por %p80, %p81
      %p83 = scmp.ne.s32.totalorder %s74, %s75
      %p84 = scmp.eq.s32.totalorder %s22, 0
      %p85 = por %p83, %p84
      %p86 = scmp.ne.s32.totalorder %s74, %s75
      %p87 = scmp.eq.s32.totalorder %s23, 1
      %p88 = por %p86, %p87
      %p90 = scmp.ne.s32.totalorder %s75, %s89
      %p91 = scmp.eq.s32.totalorder %s23, 0
      %p92 = por %p90, %p91
      %s94 = sadd.s32 %s93, 1
      %p97 = scmp.eq.s32.totalorder %s17, 1
      %p98 = scmp.ne.s32.totalorder %s93, %s95
      %p99 = scmp.eq.s32.totalorder %s17, 0
      %p100 = por %p98, %p99
      %p101 = scmp.ne.s32.totalorder %s93, %s95
      %p102 = scmp.eq.s32.totalorder %s22, 1
      %p103 = por %p101, %p102
      %p104 = scmp.ne.s32.totalorder %s95, %s96
      %p105 = scmp.eq.s32.totalorder %s22, 0
      %p106 = por %p104, %p105
      %p107 = scmp.ne.s32.totalorder %s95, %s96
      %p108 = scmp.eq.s32.totalorder %s23, 1
      %p109 = por %p107, %p108
      %p111 = scmp.ne.s32.totalorder %s96, %s110
      %p112 = scmp.eq.s32.totalorder %s23, 0
      %p113 = por %p111, %p112
      %s115 = sadd.s32 %s114, 1
      %p118 = scmp.eq.s32.totalorder %s17, 1
      %p119 = scmp.ne.s32.totalorder %s114, %s116
      %p120 = scmp.eq.s32.totalorder %s17, 0
      %p121 = por %p119, %p120
      %p122 = scmp.ne.s32.totalorder %s114, %s116
      %p123 = scmp.eq.s32.totalorder %s22, 1
      %p124 = por %p122, %p123
      %p125 = scmp.ne.s32.totalorder %s116, %s117
      %p126 = scmp.eq.s32.totalorder %s22, 0
      %p127 = por %p125, %p126
      %p128 = scmp.ne.s32.totalorder %s116, %s117
      %p129 = scmp.eq.s32.totalorder %s23, 1
      %p130 = por %p128, %p129
      %p132 = scmp.ne.s32.totalorder %s117, %s131
      %p133 = scmp.eq.s32.totalorder %s23, 0
      %p134 = por %p132, %p133
      %s135 = ssub.s32 %s17, %s24
      %p136 = scmp.eq.s32.totalorder %s135, 0
      %s138 = sadd.s32 %s137, 1
      %s139 = scalar_select %p136, %s137, %s138
      %p142 = pneg %p136
      %p143 = scmp.eq.s32.totalorder %s17, 1
      %p144 = por %p142, %p143
      %p145 = scmp.ne.s32.totalorder %s137, %s140
      %p146 = scmp.eq.s32.totalorder %s17, 0
      %p147 = por %p145, %p146
      %p148 = scmp.ne.s32.totalorder %s137, %s140
      %p149 = scmp.eq.s32.totalorder %s22, 1
      %p150 = por %p148, %p149
      %p151 = scmp.ne.s32.totalorder %s140, %s141
      %p152 = scmp.eq.s32.totalorder %s22, 0
      %p153 = por %p151, %p152
      %p154 = scmp.ne.s32.totalorder %s140, %s141
      %p155 = scmp.eq.s32.totalorder %s23, 1
      %p156 = por %p154, %p155
      %p158 = scmp.ne.s32.totalorder %s141, %s157
      %p159 = scmp.eq.s32.totalorder %s23, 0
      %p160 = por %p158, %p159
      %p161 = scmp.le.s32.totalorder 1, %s17
      %p162 = scmp.lt.s32.totalorder %s17, 3
      %p163 = pnand %p161, %p162
      %p164 = pneg %p163
      // Predicated region
      $region9: #{tpu_custom_call.1} parent=5 // pred_check
        _
      $region10: #{tpu_custom_call.1} parent=5 // pred_check_branch
        %166 = sbr.rel (%p163) target = $region12
      $region11: #{tpu_custom_call.1} parent=5 // pred_region
        %s167 = ssub.s32 %s17, 1
        // Predicated region
        $region13: #{tpu_custom_call.1} parent=11 // pred_check
          %p168 = pneg %p64
        $region14: #{tpu_custom_call.1} parent=11 // pred_check_branch
          %170 = sbr.rel (%p168) target = $region16
        $region15: #{tpu_custom_call.1} parent=11 // pred_region
          %s172 = ssub.s32 4096, 4096
          %173 = vsyncadd [#allocation6], %s172
          %s174 = sshll.u32 [#allocation5], 4
          %s175 = int_to_ptr.vmem [resolvable:$true] %s174
          %180 = dma.hbm_to_vmem [thread:$0]  %s1, 4096, %s175, [#allocation6], 256, 256, 16
        $region16: #{tpu_custom_call.1} parent=11 // pred_fallthru
          _
        // Predicated region
        $region17: #{tpu_custom_call.1} parent=11 // pred_check
          %p181 = pneg %p85
        $region18: #{tpu_custom_call.1} parent=11 // pred_check_branch
          %183 = sbr.rel (%p181) target = $region20
        $region19: #{tpu_custom_call.1} parent=11 // pred_region
          %s185 = ssub.s32 64, 64
          %186 = vsyncadd [#allocation6], %s185
          %s188 = sshll.u32 [#allocation7], 4
          %s189 = int_to_ptr.vmem [resolvable:$true] %s188
          %191 = dma.hbm_to_vmem [thread:$0]  %s2, 64, %s189, [#allocation6]
        $region20: #{tpu_custom_call.1} parent=11 // pred_fallthru
          _
        // Predicated region
        $region21: #{tpu_custom_call.1} parent=11 // pred_check
          %p192 = pneg %p106
        $region22: #{tpu_custom_call.1} parent=11 // pred_check_branch
          %194 = sbr.rel (%p192) target = $region24
        $region23: #{tpu_custom_call.1} parent=11 // pred_region
          %s196 = ssub.s32 128, 128
          %197 = vsyncadd [#allocation9], %s196
          %s199 = sshll.u32 [#allocation8], 4
          %s200 = int_to_ptr.vmem [resolvable:$true] %s199
          %202 = dma.hbm_to_vmem [thread:$0]  %s3, 128, %s200, [#allocation9]
        $region24: #{tpu_custom_call.1} parent=11 // pred_fallthru
          _
        // Predicated region
        $region25: #{tpu_custom_call.1} parent=11 // pred_check
          %p203 = pneg %p127
        $region26: #{tpu_custom_call.1} parent=11 // pred_check_branch
          %205 = sbr.rel (%p203) target = $region28
        $region27: #{tpu_custom_call.1} parent=11 // pred_region
          %s207 = ssub.s32 16, 16
          %208 = vsyncadd [#allocation4], %s207
          %s210 = sshll.u32 %s4, 4
          %s211 = int_to_ptr.vmem [resolvable:$true] %s210
          %213 = dma.vmem_to_smem %s211, 16, [#allocation10], [#allocation4]
        $region28: #{tpu_custom_call.1} parent=11 // pred_fallthru
          _
      $region12: #{tpu_custom_call.1} parent=5 // pred_fallthru
        _
      %p214 = scmp.lt.s32.totalorder %s17, 2
      // Predicated region
      $region29: #{tpu_custom_call.1} parent=5 // pred_check
        %p215 = pneg %p214
      $region30: #{tpu_custom_call.1} parent=5 // pred_check_branch
        %217 = sbr.rel (%p215) target = $region32
      $region31: #{tpu_custom_call.1} parent=5 // pred_region
        // Predicated region
        $region33: #{tpu_custom_call.1} parent=31 // pred_check
          %p218 = pneg %p37
        $region34: #{tpu_custom_call.1} parent=31 // pred_check_branch
          %220 = sbr.rel (%p218) target = $region36
        $region35: #{tpu_custom_call.1} parent=31 // pred_region
          %s221 = sand.u32 %s27, 1
          %s222 = scalar_lea.sflag [#allocation3], %s221
          %s223 = sand.u32 %s27, 1
          %s224 = smul.addr %s223, 128
          %s225 = scalar_lea.vmem [#allocation2], %s224
          %s226 = smul.u32 32, %s17
          %s228 = ssub.s32 2048, 2048
          %229 = vsyncadd %s222, %s228
          %s230 = smul.addr %s226, 64
          %s231 = scalar_lea.hbm %s0, %s230
          %s232 = sshll.u32 %s225, 4
          %s233 = int_to_ptr.vmem [resolvable:$true] %s232
          %238 = dma.hbm_to_vmem [thread:$0]  %s231, 2048, %s233, %s222, 64, 64, 4
        $region36: #{tpu_custom_call.1} parent=31 // pred_fallthru
          _
      $region32: #{tpu_custom_call.1} parent=5 // pred_fallthru
        _
      %p239 = scmp.le.s32.totalorder 1, %s17
      %p240 = scmp.lt.s32.totalorder %s17, 3
      %p241 = pnand %p239, %p240
      %p242 = pneg %p241
      // Predicated region
      $region37: #{tpu_custom_call.1} parent=5 // pred_check
        _
      $region38: #{tpu_custom_call.1} parent=5 // pred_check_branch
        %244 = sbr.rel (%p241) target = $region40
      $region39: #{tpu_custom_call.1} parent=5 // pred_region
        %s245 = ssub.s32 %s17, 1
        %s246 = sand.u32 %s30, 1
        %s247 = scalar_lea.sflag [#allocation3], %s246
        %s248 = sand.u32 %s30, 1
        %s249 = smul.addr %s248, 128
        %s250 = scalar_lea.vmem [#allocation2], %s249
        // Predicated region
        $region41: #{tpu_custom_call.1} parent=39 // pred_check
          %p251 = pneg %p43
        $region42: #{tpu_custom_call.1} parent=39 // pred_check_branch
          %253 = sbr.rel (%p251) target = $region44
        $region43: #{tpu_custom_call.1} parent=39 // pred_region
          %254 = dma.done %s247, 2048
        $region44: #{tpu_custom_call.1} parent=39 // pred_fallthru
          _
        // Predicated region
        $region45: #{tpu_custom_call.1} parent=39 // pred_check
          %p255 = pneg %p64
        $region46: #{tpu_custom_call.1} parent=39 // pred_check_branch
          %257 = sbr.rel (%p255) target = $region48
        $region47: #{tpu_custom_call.1} parent=39 // pred_region
          %258 = dma.done [#allocation6], 4096
        $region48: #{tpu_custom_call.1} parent=39 // pred_fallthru
          _
        // Predicated region
        $region49: #{tpu_custom_call.1} parent=39 // pred_check
          %p259 = pneg %p85
        $region50: #{tpu_custom_call.1} parent=39 // pred_check_branch
          %261 = sbr.rel (%p259) target = $region52
        $region51: #{tpu_custom_call.1} parent=39 // pred_region
          %262 = dma.done [#allocation6], 64
        $region52: #{tpu_custom_call.1} parent=39 // pred_fallthru
          _
        // Predicated region
        $region53: #{tpu_custom_call.1} parent=39 // pred_check
          %p263 = pneg %p106
        $region54: #{tpu_custom_call.1} parent=39 // pred_check_branch
          %265 = sbr.rel (%p263) target = $region56
        $region55: #{tpu_custom_call.1} parent=39 // pred_region
          %266 = dma.done [#allocation9], 128
        $region56: #{tpu_custom_call.1} parent=39 // pred_fallthru
          _
        // Predicated region
        $region57: #{tpu_custom_call.1} parent=39 // pred_check
          %p267 = pneg %p127
        $region58: #{tpu_custom_call.1} parent=39 // pred_check_branch
          %269 = sbr.rel (%p267) target = $region60
        $region59: #{tpu_custom_call.1} parent=39 // pred_region
          %270 = dma.done [#allocation4], 16
        $region60: #{tpu_custom_call.1} parent=39 // pred_fallthru
          _
        %271 = sfence
        %s272 = sand.u32 %s30, 1
        %s273 = scalar_lea.sflag [#allocation3], %s272
        %s274 = sand.u32 %s30, 1
        %s275 = smul.addr %s274, 128
        %s276 = scalar_lea.vmem [#allocation2], %s275
        %p277 = pneg %p43
        %p278 = pneg %p40
        %p279 = pneg %p64
        %p280 = pneg %p61
        %p281 = pneg %p85
        %p282 = pneg %p82
        %p283 = pneg %p106
        %p284 = pneg %p103
        %p285 = pneg %p127
        %p286 = pneg %p124
        %p287 = pneg %p153
        %p288 = pneg %p150
        %s289 = smul.u32 32, %s22
        %p290 = scmp.lt.s32.totalorder %s289, 63
        %s291 = scalar_select %p290, %s289, 63
        %s292 = smul.addr %s291, 8
        %s293 = scalar_lea.vmem %s5, %s292
        %s294 = smul.u32 32, %s22
        %s295 = smul.u32 32, %s22
        %p296 = scmp.lt.s32.totalorder %s295, 63
        %s297 = scalar_select %p296, %s295, 63
        %s298 = smul.addr %s297, 8
        %s299 = scalar_lea.vmem %s5, %s298
        %s300 = smul.u32 32, %s22
        %v302 = vld [vmem:[%s250] sm:$0xf]
        %v303 = vld [vmem:[%s250 + $0x4] sm:$0xf]
        %v304 = vld [vmem:[%s250 + $0x8] sm:$0xf]
        %v305 = vld [vmem:[%s250 + $0xc] sm:$0xf]
        %v306 = vld [vmem:[%s250 + $0x10] sm:$0xf]
        %v307 = vld [vmem:[%s250 + $0x14] sm:$0xf]
        %v308 = vld [vmem:[%s250 + $0x18] sm:$0xf]
        %v309 = vld [vmem:[%s250 + $0x1c] sm:$0xf]
        %v310 = vld [vmem:[%s250 + $0x20] sm:$0xf]
        %v311 = vld [vmem:[%s250 + $0x24] sm:$0xf]
        %v312 = vld [vmem:[%s250 + $0x28] sm:$0xf]
        %v313 = vld [vmem:[%s250 + $0x2c] sm:$0xf]
        %v314 = vld [vmem:[%s250 + $0x30] sm:$0xf]
        %v315 = vld [vmem:[%s250 + $0x34] sm:$0xf]
        %v316 = vld [vmem:[%s250 + $0x38] sm:$0xf]
        %v317 = vld [vmem:[%s250 + $0x3c] sm:$0xf]
        %v318 = vld [vmem:[%s250 + $0x40] sm:$0xf]
        %v319 = vld [vmem:[%s250 + $0x44] sm:$0xf]
        %v320 = vld [vmem:[%s250 + $0x48] sm:$0xf]
        %v321 = vld [vmem:[%s250 + $0x4c] sm:$0xf]
        %v322 = vld [vmem:[%s250 + $0x50] sm:$0xf]
        %v323 = vld [vmem:[%s250 + $0x54] sm:$0xf]
        %v324 = vld [vmem:[%s250 + $0x58] sm:$0xf]
        %v325 = vld [vmem:[%s250 + $0x5c] sm:$0xf]
        %v326 = vld [vmem:[%s250 + $0x60] sm:$0xf]
        %v327 = vld [vmem:[%s250 + $0x64] sm:$0xf]
        %v328 = vld [vmem:[%s250 + $0x68] sm:$0xf]
        %v329 = vld [vmem:[%s250 + $0x6c] sm:$0xf]
        %v330 = vld [vmem:[%s250 + $0x70] sm:$0xf]
        %v331 = vld [vmem:[%s250 + $0x74] sm:$0xf]
        %v332 = vld [vmem:[%s250 + $0x78] sm:$0xf]
        %v333 = vld [vmem:[%s250 + $0x7c] sm:$0xf]
        %v334 = vld [vmem:[#allocation5] sm:$0xff]
        %v335 = vld [vmem:[#allocation5 + $0x8] sm:$0xff]
        %v336 = vld [vmem:[#allocation5 + $0x10] sm:$0xff]
        %v337 = vld [vmem:[#allocation5 + $0x18] sm:$0xff]
        %v338 = vld [vmem:[#allocation5 + $0x20] sm:$0xff]
        %v339 = vld [vmem:[#allocation5 + $0x28] sm:$0xff]
        %v340 = vld [vmem:[#allocation5 + $0x30] sm:$0xff]
        %v341 = vld [vmem:[#allocation5 + $0x38] sm:$0xff]
        %v342 = vld [vmem:[#allocation5 + $0x40] sm:$0xff]
        %v343 = vld [vmem:[#allocation5 + $0x48] sm:$0xff]
        %v344 = vld [vmem:[#allocation5 + $0x50] sm:$0xff]
        %v345 = vld [vmem:[#allocation5 + $0x58] sm:$0xff]
        %v346 = vld [vmem:[#allocation5 + $0x60] sm:$0xff]
        %v347 = vld [vmem:[#allocation5 + $0x68] sm:$0xff]
        %v348 = vld [vmem:[#allocation5 + $0x70] sm:$0xff]
        %v349 = vld [vmem:[#allocation5 + $0x78] sm:$0xff]
        %v350 = vld [vmem:[#allocation5 + $0x80] sm:$0xff]
        %v351 = vld [vmem:[#allocation5 + $0x88] sm:$0xff]
        %v352 = vld [vmem:[#allocation5 + $0x90] sm:$0xff]
        %v353 = vld [vmem:[#allocation5 + $0x98] sm:$0xff]
        %v354 = vld [vmem:[#allocation5 + $0xa0] sm:$0xff]
        %v355 = vld [vmem:[#allocation5 + $0xa8] sm:$0xff]
        %v356 = vld [vmem:[#allocation5 + $0xb0] sm:$0xff]
        %v357 = vld [vmem:[#allocation5 + $0xb8] sm:$0xff]
        %v358 = vld [vmem:[#allocation5 + $0xc0] sm:$0xff]
        %v359 = vld [vmem:[#allocation5 + $0xc8] sm:$0xff]
        %v360 = vld [vmem:[#allocation5 + $0xd0] sm:$0xff]
        %v361 = vld [vmem:[#allocation5 + $0xd8] sm:$0xff]
        %v362 = vld [vmem:[#allocation5 + $0xe0] sm:$0xff]
        %v363 = vld [vmem:[#allocation5 + $0xe8] sm:$0xff]
        %v364 = vld [vmem:[#allocation5 + $0xf0] sm:$0xff]
        %v365 = vld [vmem:[#allocation5 + $0xf8] sm:$0xff]
        %v366 = vld [vmem:[#allocation7] sm:$0xf]
        %v368 = vlaneseq
        %v369 = vshrl.u32 %v368, 7
        %v370 = vsub.s32 0, %v369
        %v371 = vrot.slane %v366, %v370
        %v372 = vlaneseq
        %v373 = vshrl.u32 %v372, 7
        %v374 = vsub.s32 1, %v373
        %v375 = vrot.slane %v366, %v374
        %v376 = vlaneseq
        %v377 = vshrl.u32 %v376, 7
        %v378 = vsub.s32 2, %v377
        %v379 = vrot.slane %v366, %v378
        %v380 = vlaneseq
        %v381 = vshrl.u32 %v380, 7
        %v382 = vsub.s32 3, %v381
        %v383 = vrot.slane %v366, %v382
        %v420 = vunpack.c.l.b16 %v302
        %v421 = vunpack.c.l.b16 %v303
        %v422 = vunpack.c.l.b16 %v304
        %v423 = vunpack.c.l.b16 %v305
        %v424 = vunpack.c.l.b16 %v306
        %v425 = vunpack.c.l.b16 %v307
        %v426 = vunpack.c.l.b16 %v308
        %v427 = vunpack.c.l.b16 %v309
        %v428 = vunpack.c.l.b16 %v310
        %v429 = vunpack.c.l.b16 %v311
        %v430 = vunpack.c.l.b16 %v312
        %v431 = vunpack.c.l.b16 %v313
        %v432 = vunpack.c.l.b16 %v314
        %v433 = vunpack.c.l.b16 %v315
        %v434 = vunpack.c.l.b16 %v316
        %v435 = vunpack.c.l.b16 %v317
        %v436 = vunpack.c.l.b16 %v318
        %v437 = vunpack.c.l.b16 %v319
        %v438 = vunpack.c.l.b16 %v320
        %v439 = vunpack.c.l.b16 %v321
        %v440 = vunpack.c.l.b16 %v322
        %v441 = vunpack.c.l.b16 %v323
        %v442 = vunpack.c.l.b16 %v324
        %v443 = vunpack.c.l.b16 %v325
        %v444 = vunpack.c.l.b16 %v326
        %v445 = vunpack.c.l.b16 %v327
        %v446 = vunpack.c.l.b16 %v328
        %v447 = vunpack.c.l.b16 %v329
        %v448 = vunpack.c.l.b16 %v330
        %v449 = vunpack.c.l.b16 %v331
        %v450 = vunpack.c.l.b16 %v332
        %v451 = vunpack.c.l.b16 %v333
        %v452 = vpack.c.b16 %v421, %v420
        %v453 = vpack.c.b16 %v423, %v422
        %v454 = vpack.c.b16 %v425, %v424
        %v455 = vpack.c.b16 %v427, %v426
        %v456 = vpack.c.b16 %v429, %v428
        %v457 = vpack.c.b16 %v431, %v430
        %v458 = vpack.c.b16 %v433, %v432
        %v459 = vpack.c.b16 %v435, %v434
        %v460 = vpack.c.b16 %v437, %v436
        %v461 = vpack.c.b16 %v439, %v438
        %v462 = vpack.c.b16 %v441, %v440
        %v463 = vpack.c.b16 %v443, %v442
        %v464 = vpack.c.b16 %v445, %v444
        %v465 = vpack.c.b16 %v447, %v446
        %v466 = vpack.c.b16 %v449, %v448
        %v467 = vpack.c.b16 %v451, %v450
        %v516 = vunpack.c.l.b16 %v334
        %v517 = vunpack.c.h.b16 %v334
        %v518 = vunpack.c.l.b16 %v335
        %v519 = vunpack.c.h.b16 %v335
        %v520 = vunpack.c.l.b16 %v336
        %v521 = vunpack.c.h.b16 %v336
        %v522 = vunpack.c.l.b16 %v337
        %v523 = vunpack.c.h.b16 %v337
        %v524 = vunpack.c.l.b16 %v338
        %v525 = vunpack.c.h.b16 %v338
        %v526 = vunpack.c.l.b16 %v339
        %v527 = vunpack.c.h.b16 %v339
        %v528 = vunpack.c.l.b16 %v340
        %v529 = vunpack.c.h.b16 %v340
        %v530 = vunpack.c.l.b16 %v341
        %v531 = vunpack.c.h.b16 %v341
        %v532 = vunpack.c.l.b16 %v342
        %v533 = vunpack.c.h.b16 %v342
        %v534 = vunpack.c.l.b16 %v343
        %v535 = vunpack.c.h.b16 %v343
        %v536 = vunpack.c.l.b16 %v344
        %v537 = vunpack.c.h.b16 %v344
        %v538 = vunpack.c.l.b16 %v345
        %v539 = vunpack.c.h.b16 %v345
        %v540 = vunpack.c.l.b16 %v346
        %v541 = vunpack.c.h.b16 %v346
        %v542 = vunpack.c.l.b16 %v347
        %v543 = vunpack.c.h.b16 %v347
        %v544 = vunpack.c.l.b16 %v348
        %v545 = vunpack.c.h.b16 %v348
        %v546 = vunpack.c.l.b16 %v349
        %v547 = vunpack.c.h.b16 %v349
        %v548 = vunpack.c.l.b16 %v350
        %v549 = vunpack.c.h.b16 %v350
        %v550 = vunpack.c.l.b16 %v351
        %v551 = vunpack.c.h.b16 %v351
        %v552 = vunpack.c.l.b16 %v352
        %v553 = vunpack.c.h.b16 %v352
        %v554 = vunpack.c.l.b16 %v353
        %v555 = vunpack.c.h.b16 %v353
        %v556 = vunpack.c.l.b16 %v354
        %v557 = vunpack.c.h.b16 %v354
        %v558 = vunpack.c.l.b16 %v355
        %v559 = vunpack.c.h.b16 %v355
        %v560 = vunpack.c.l.b16 %v356
        %v561 = vunpack.c.h.b16 %v356
        %v562 = vunpack.c.l.b16 %v357
        %v563 = vunpack.c.h.b16 %v357
        %v564 = vunpack.c.l.b16 %v358
        %v565 = vunpack.c.h.b16 %v358
        %v566 = vunpack.c.l.b16 %v359
        %v567 = vunpack.c.h.b16 %v359
        %v568 = vunpack.c.l.b16 %v360
        %v569 = vunpack.c.h.b16 %v360
        %v570 = vunpack.c.l.b16 %v361
        %v571 = vunpack.c.h.b16 %v361
        %v572 = vunpack.c.l.b16 %v362
        %v573 = vunpack.c.h.b16 %v362
        %v574 = vunpack.c.l.b16 %v363
        %v575 = vunpack.c.h.b16 %v363
        %v576 = vunpack.c.l.b16 %v364
        %v577 = vunpack.c.h.b16 %v364
        %v578 = vunpack.c.l.b16 %v365
        %v579 = vunpack.c.h.b16 %v365
        %v580 = vpack.c.b16 %v520, %v516
        %v581 = vpack.c.b16 %v521, %v517
        %v582 = vpack.c.b16 %v522, %v518
        %v583 = vpack.c.b16 %v523, %v519
        %v584 = vpack.c.b16 %v528, %v524
        %v585 = vpack.c.b16 %v529, %v525
        %v586 = vpack.c.b16 %v530, %v526
        %v587 = vpack.c.b16 %v531, %v527
        %v588 = vpack.c.b16 %v536, %v532
        %v589 = vpack.c.b16 %v537, %v533
        %v590 = vpack.c.b16 %v538, %v534
        %v591 = vpack.c.b16 %v539, %v535
        %v592 = vpack.c.b16 %v544, %v540
        %v593 = vpack.c.b16 %v545, %v541
        %v594 = vpack.c.b16 %v546, %v542
        %v595 = vpack.c.b16 %v547, %v543
        %v596 = vpack.c.b16 %v552, %v548
        %v597 = vpack.c.b16 %v553, %v549
        %v598 = vpack.c.b16 %v554, %v550
        %v599 = vpack.c.b16 %v555, %v551
        %v600 = vpack.c.b16 %v560, %v556
        %v601 = vpack.c.b16 %v561, %v557
        %v602 = vpack.c.b16 %v562, %v558
        %v603 = vpack.c.b16 %v563, %v559
        %v604 = vpack.c.b16 %v568, %v564
        %v605 = vpack.c.b16 %v569, %v565
        %v606 = vpack.c.b16 %v570, %v566
        %v607 = vpack.c.b16 %v571, %v567
        %v608 = vpack.c.b16 %v576, %v572
        %v609 = vpack.c.b16 %v577, %v573
        %v610 = vpack.c.b16 %v578, %v574
        %v611 = vpack.c.b16 %v579, %v575
        %644 = vmatprep.subr.bf16.mxu0 %v609
        %645 = vmatpush1.bf16.msra.mxu0 %v608
        %646 = vmatprep.subr.bf16.mxu0 %v605
        %647 = vmatpush1.bf16.msra.mxu0 %v604
        %648 = vmatprep.subr.bf16.mxu0 %v601
        %649 = vmatpush1.bf16.msra.mxu0 %v600
        %650 = vmatprep.subr.bf16.mxu0 %v597
        %651 = vmatpush1.bf16.msra.mxu0 %v596
        %652 = vmatprep.subr.bf16.mxu0 %v593
        %653 = vmatpush1.bf16.msra.mxu0 %v592
        %654 = vmatprep.subr.bf16.mxu0 %v589
        %655 = vmatpush1.bf16.msra.mxu0 %v588
        %656 = vmatprep.subr.bf16.mxu0 %v585
        %657 = vmatpush1.bf16.msra.mxu0 %v584
        %658 = vmatprep.subr.bf16.mxu0 %v581
        %659 = vmatpush1.bf16.msra.mxu0 %v580
        %660 = vmatprep.subr.bf16.mxu0 0
        %661 = vmatpush2.bf16.msra.mxu0 0
        %662 = vmatprep.subr.bf16.mxu0 0
        %663 = vmatpush2.bf16.msra.mxu0 0
        %664 = vmatprep.subr.bf16.mxu0 0
        %665 = vmatpush2.bf16.msra.mxu0 0
        %666 = vmatprep.subr.bf16.mxu0 0
        %667 = vmatpush2.bf16.msra.mxu0 0
        %668 = vmatprep.subr.bf16.mxu0 0
        %669 = vmatpush2.bf16.msra.mxu0 0
        %670 = vmatprep.subr.bf16.mxu0 0
        %671 = vmatpush2.bf16.msra.mxu0 0
        %672 = vmatprep.subr.bf16.mxu0 0
        %673 = vmatpush2.bf16.msra.mxu0 0
        %674 = vmatprep.subr.bf16.mxu0 0
        %675 = vmatpush2.bf16.msra.mxu0 0
        %676 = vmatprep.mubr.bf16.mxu0 0
        %677 = vmatmul.mubr.bf16.gmra.mxu0 %v452
        %v678 = vpop.f32.mrf.mxu0
        %v679 = vadd.f32 %v371, %v678
        %v680 = vpop.f32.mrf.mxu0
        %v681 = vadd.f32 %v375, %v680
        %v682 = vpop.f32.mrf.mxu0
        %v683 = vadd.f32 %v371, %v682
        %v684 = vpop.f32.mrf.mxu0
        %v685 = vadd.f32 %v375, %v684
        %686 = vmatprep.mubr.bf16.mxu0 0
        %687 = vmatmul.mubr.bf16.gmra.mxu0 %v453
        %v688 = vpop.f32.mrf.mxu0
        %v689 = vadd.f32 %v371, %v688
        %v690 = vpop.f32.mrf.mxu0
        %v691 = vadd.f32 %v375, %v690
        %v692 = vpop.f32.mrf.mxu0
        %v693 = vadd.f32 %v371, %v692
        %v694 = vpop.f32.mrf.mxu0
        %v695 = vadd.f32 %v375, %v694
        %696 = vmatprep.mubr.bf16.mxu0 0
        %697 = vmatmul.mubr.bf16.gmra.mxu0 %v454
        %v698 = vpop.f32.mrf.mxu0
        %v699 = vadd.f32 %v371, %v698
        %v700 = vpop.f32.mrf.mxu0
        %v701 = vadd.f32 %v375, %v700
        %v702 = vpop.f32.mrf.mxu0
        %v703 = vadd.f32 %v371, %v702
        %v704 = vpop.f32.mrf.mxu0
        %v705 = vadd.f32 %v375, %v704
        %706 = vmatprep.mubr.bf16.mxu0 0
        %707 = vmatmul.mubr.bf16.gmra.mxu0 %v455
        %v708 = vpop.f32.mrf.mxu0
        %v709 = vadd.f32 %v371, %v708
        %v710 = vpop.f32.mrf.mxu0
        %v711 = vadd.f32 %v375, %v710
        %v712 = vpop.f32.mrf.mxu0
        %v713 = vadd.f32 %v371, %v712
        %v714 = vpop.f32.mrf.mxu0
        %v715 = vadd.f32 %v375, %v714
        %716 = vmatprep.mubr.bf16.mxu0 0
        %717 = vmatmul.mubr.bf16.gmra.mxu0 %v456
        %v718 = vpop.f32.mrf.mxu0
        %v719 = vadd.f32 %v371, %v718
        %v720 = vpop.f32.mrf.mxu0
        %v721 = vadd.f32 %v375, %v720
        %v722 = vpop.f32.mrf.mxu0
        %v723 = vadd.f32 %v371, %v722
        %v724 = vpop.f32.mrf.mxu0
        %v725 = vadd.f32 %v375, %v724
        %726 = vmatprep.mubr.bf16.mxu0 0
        %727 = vmatmul.mubr.bf16.gmra.mxu0 %v457
        %v728 = vpop.f32.mrf.mxu0
        %v729 = vadd.f32 %v371, %v728
        %v730 = vpop.f32.mrf.mxu0
        %v731 = vadd.f32 %v375, %v730
        %v732 = vpop.f32.mrf.mxu0
        %v733 = vadd.f32 %v371, %v732
        %v734 = vpop.f32.mrf.mxu0
        %v735 = vadd.f32 %v375, %v734
        %736 = vmatprep.mubr.bf16.mxu0 0
        %737 = vmatmul.mubr.bf16.gmra.mxu0 %v458
        %v738 = vpop.f32.mrf.mxu0
        %v739 = vadd.f32 %v371, %v738
        %v740 = vpop.f32.mrf.mxu0
        %v741 = vadd.f32 %v375, %v740
        %v742 = vpop.f32.mrf.mxu0
        %v743 = vadd.f32 %v371, %v742
        %v744 = vpop.f32.mrf.mxu0
        %v745 = vadd.f32 %v375, %v744
        %746 = vmatprep.mubr.bf16.mxu0 0
        %747 = vmatmul.mubr.bf16.gmra.mxu0 %v459
        %v748 = vpop.f32.mrf.mxu0
        %v749 = vadd.f32 %v371, %v748
        %v750 = vpop.f32.mrf.mxu0
        %v751 = vadd.f32 %v375, %v750
        %v752 = vpop.f32.mrf.mxu0
        %v753 = vadd.f32 %v371, %v752
        %v754 = vpop.f32.mrf.mxu0
        %v755 = vadd.f32 %v375, %v754
        %756 = vmatprep.mubr.bf16.mxu0 0
        %757 = vmatmul.mubr.bf16.gmra.mxu0 %v460
        %v758 = vpop.f32.mrf.mxu0
        %v759 = vadd.f32 %v371, %v758
        %v760 = vpop.f32.mrf.mxu0
        %v761 = vadd.f32 %v375, %v760
        %v762 = vpop.f32.mrf.mxu0
        %v763 = vadd.f32 %v371, %v762
        %v764 = vpop.f32.mrf.mxu0
        %v765 = vadd.f32 %v375, %v764
        %766 = vmatprep.mubr.bf16.mxu0 0
        %767 = vmatmul.mubr.bf16.gmra.mxu0 %v461
        %v768 = vpop.f32.mrf.mxu0
        %v769 = vadd.f32 %v371, %v768
        %v770 = vpop.f32.mrf.mxu0
        %v771 = vadd.f32 %v375, %v770
        %v772 = vpop.f32.mrf.mxu0
        %v773 = vadd.f32 %v371, %v772
        %v774 = vpop.f32.mrf.mxu0
        %v775 = vadd.f32 %v375, %v774
        %776 = vmatprep.mubr.bf16.mxu0 0
        %777 = vmatmul.mubr.bf16.gmra.mxu0 %v462
        %v778 = vpop.f32.mrf.mxu0
        %v779 = vadd.f32 %v371, %v778
        %v780 = vpop.f32.mrf.mxu0
        %v781 = vadd.f32 %v375, %v780
        %v782 = vpop.f32.mrf.mxu0
        %v783 = vadd.f32 %v371, %v782
        %v784 = vpop.f32.mrf.mxu0
        %v785 = vadd.f32 %v375, %v784
        %786 = vmatprep.mubr.bf16.mxu0 0
        %787 = vmatmul.mubr.bf16.gmra.mxu0 %v463
        %v788 = vpop.f32.mrf.mxu0
        %v789 = vadd.f32 %v371, %v788
        %v790 = vpop.f32.mrf.mxu0
        %v791 = vadd.f32 %v375, %v790
        %v792 = vpop.f32.mrf.mxu0
        %v793 = vadd.f32 %v371, %v792
        %v794 = vpop.f32.mrf.mxu0
        %v795 = vadd.f32 %v375, %v794
        %796 = vmatprep.mubr.bf16.mxu0 0
        %797 = vmatmul.mubr.bf16.gmra.mxu0 %v464
        %v798 = vpop.f32.mrf.mxu0
        %v799 = vadd.f32 %v371, %v798
        %v800 = vpop.f32.mrf.mxu0
        %v801 = vadd.f32 %v375, %v800
        %v802 = vpop.f32.mrf.mxu0
        %v803 = vadd.f32 %v371, %v802
        %v804 = vpop.f32.mrf.mxu0
        %v805 = vadd.f32 %v375, %v804
        %806 = vmatprep.mubr.bf16.mxu0 0
        %807 = vmatmul.mubr.bf16.gmra.mxu0 %v465
        %v808 = vpop.f32.mrf.mxu0
        %v809 = vadd.f32 %v371, %v808
        %v810 = vpop.f32.mrf.mxu0
        %v811 = vadd.f32 %v375, %v810
        %v812 = vpop.f32.mrf.mxu0
        %v813 = vadd.f32 %v371, %v812
        %v814 = vpop.f32.mrf.mxu0
        %v815 = vadd.f32 %v375, %v814
        %816 = vmatprep.mubr.bf16.mxu0 0
        %817 = vmatmul.mubr.bf16.gmra.mxu0 %v466
        %v818 = vpop.f32.mrf.mxu0
        %v819 = vadd.f32 %v371, %v818
        %v820 = vpop.f32.mrf.mxu0
        %v821 = vadd.f32 %v375, %v820
        %v822 = vpop.f32.mrf.mxu0
        %v823 = vadd.f32 %v371, %v822
        %v824 = vpop.f32.mrf.mxu0
        %v825 = vadd.f32 %v375, %v824
        %826 = vmatprep.mubr.bf16.mxu0 0
        %827 = vmatmul.mubr.bf16.gmra.mxu0 %v467
        %v828 = vpop.f32.mrf.mxu0
        %v829 = vadd.f32 %v371, %v828
        %v830 = vpop.f32.mrf.mxu0
        %v831 = vadd.f32 %v375, %v830
        %v832 = vpop.f32.mrf.mxu0
        %v833 = vadd.f32 %v371, %v832
        %v834 = vpop.f32.mrf.mxu0
        %v835 = vadd.f32 %v375, %v834
        %836 = vdwg.mxu0
        %837 = vmatprep.subr.bf16.mxu0 %v611
        %838 = vmatpush1.bf16.msra.mxu0 %v610
        %839 = vmatprep.subr.bf16.mxu0 %v607
        %840 = vmatpush1.bf16.msra.mxu0 %v606
        %841 = vmatprep.subr.bf16.mxu0 %v603
        %842 = vmatpush1.bf16.msra.mxu0 %v602
        %843 = vmatprep.subr.bf16.mxu0 %v599
        %844 = vmatpush1.bf16.msra.mxu0 %v598
        %845 = vmatprep.subr.bf16.mxu0 %v595
        %846 = vmatpush1.bf16.msra.mxu0 %v594
        %847 = vmatprep.subr.bf16.mxu0 %v591
        %848 = vmatpush1.bf16.msra.mxu0 %v590
        %849 = vmatprep.subr.bf16.mxu0 %v587
        %850 = vmatpush1.bf16.msra.mxu0 %v586
        %851 = vmatprep.subr.bf16.mxu0 %v583
        %852 = vmatpush1.bf16.msra.mxu0 %v582
        %853 = vmatprep.subr.bf16.mxu0 0
        %854 = vmatpush2.bf16.msra.mxu0 0
        %855 = vmatprep.subr.bf16.mxu0 0
        %856 = vmatpush2.bf16.msra.mxu0 0
        %857 = vmatprep.subr.bf16.mxu0 0
        %858 = vmatpush2.bf16.msra.mxu0 0
        %859 = vmatprep.subr.bf16.mxu0 0
        %860 = vmatpush2.bf16.msra.mxu0 0
        %861 = vmatprep.subr.bf16.mxu0 0
        %862 = vmatpush2.bf16.msra.mxu0 0
        %863 = vmatprep.subr.bf16.mxu0 0
        %864 = vmatpush2.bf16.msra.mxu0 0
        %865 = vmatprep.subr.bf16.mxu0 0
        %866 = vmatpush2.bf16.msra.mxu0 0
        %867 = vmatprep.subr.bf16.mxu0 0
        %868 = vmatpush2.bf16.msra.mxu0 0
        %869 = vmatprep.mubr.bf16.mxu0 0
        %870 = vmatmul.mubr.bf16.gmra.mxu0 %v452
        %v871 = vpop.f32.mrf.mxu0
        %v872 = vadd.f32 %v379, %v871
        %v873 = vpop.f32.mrf.mxu0
        %v874 = vadd.f32 %v383, %v873
        %v875 = vpop.f32.mrf.mxu0
        %v876 = vadd.f32 %v379, %v875
        %v877 = vpop.f32.mrf.mxu0
        %v878 = vadd.f32 %v383, %v877
        %879 = vmatprep.mubr.bf16.mxu0 0
        %880 = vmatmul.mubr.bf16.gmra.mxu0 %v453
        %v881 = vpop.f32.mrf.mxu0
        %v882 = vadd.f32 %v379, %v881
        %v883 = vpop.f32.mrf.mxu0
        %v884 = vadd.f32 %v383, %v883
        %v885 = vpop.f32.mrf.mxu0
        %v886 = vadd.f32 %v379, %v885
        %v887 = vpop.f32.mrf.mxu0
        %v888 = vadd.f32 %v383, %v887
        %889 = vmatprep.mubr.bf16.mxu0 0
        %890 = vmatmul.mubr.bf16.gmra.mxu0 %v454
        %v891 = vpop.f32.mrf.mxu0
        %v892 = vadd.f32 %v379, %v891
        %v893 = vpop.f32.mrf.mxu0
        %v894 = vadd.f32 %v383, %v893
        %v895 = vpop.f32.mrf.mxu0
        %v896 = vadd.f32 %v379, %v895
        %v897 = vpop.f32.mrf.mxu0
        %v898 = vadd.f32 %v383, %v897
        %899 = vmatprep.mubr.bf16.mxu0 0
        %900 = vmatmul.mubr.bf16.gmra.mxu0 %v455
        %v901 = vpop.f32.mrf.mxu0
        %v902 = vadd.f32 %v379, %v901
        %v903 = vpop.f32.mrf.mxu0
        %v904 = vadd.f32 %v383, %v903
        %v905 = vpop.f32.mrf.mxu0
        %v906 = vadd.f32 %v379, %v905
        %v907 = vpop.f32.mrf.mxu0
        %v908 = vadd.f32 %v383, %v907
        %909 = vmatprep.mubr.bf16.mxu0 0
        %910 = vmatmul.mubr.bf16.gmra.mxu0 %v456
        %v911 = vpop.f32.mrf.mxu0
        %v912 = vadd.f32 %v379, %v911
        %v913 = vpop.f32.mrf.mxu0
        %v914 = vadd.f32 %v383, %v913
        %v915 = vpop.f32.mrf.mxu0
        %v916 = vadd.f32 %v379, %v915
        %v917 = vpop.f32.mrf.mxu0
        %v918 = vadd.f32 %v383, %v917
        %919 = vmatprep.mubr.bf16.mxu0 0
        %920 = vmatmul.mubr.bf16.gmra.mxu0 %v457
        %v921 = vpop.f32.mrf.mxu0
        %v922 = vadd.f32 %v379, %v921
        %v923 = vpop.f32.mrf.mxu0
        %v924 = vadd.f32 %v383, %v923
        %v925 = vpop.f32.mrf.mxu0
        %v926 = vadd.f32 %v379, %v925
        %v927 = vpop.f32.mrf.mxu0
        %v928 = vadd.f32 %v383, %v927
        %929 = vmatprep.mubr.bf16.mxu0 0
        %930 = vmatmul.mubr.bf16.gmra.mxu0 %v458
        %v931 = vpop.f32.mrf.mxu0
        %v932 = vadd.f32 %v379, %v931
        %v933 = vpop.f32.mrf.mxu0
        %v934 = vadd.f32 %v383, %v933
        %v935 = vpop.f32.mrf.mxu0
        %v936 = vadd.f32 %v379, %v935
        %v937 = vpop.f32.mrf.mxu0
        %v938 = vadd.f32 %v383, %v937
        %939 = vmatprep.mubr.bf16.mxu0 0
        %940 = vmatmul.mubr.bf16.gmra.mxu0 %v459
        %v941 = vpop.f32.mrf.mxu0
        %v942 = vadd.f32 %v379, %v941
        %v943 = vpop.f32.mrf.mxu0
        %v944 = vadd.f32 %v383, %v943
        %v945 = vpop.f32.mrf.mxu0
        %v946 = vadd.f32 %v379, %v945
        %v947 = vpop.f32.mrf.mxu0
        %v948 = vadd.f32 %v383, %v947
        %949 = vmatprep.mubr.bf16.mxu0 0
        %950 = vmatmul.mubr.bf16.gmra.mxu0 %v460
        %v951 = vpop.f32.mrf.mxu0
        %v952 = vadd.f32 %v379, %v951
        %v953 = vpop.f32.mrf.mxu0
        %v954 = vadd.f32 %v383, %v953
        %v955 = vpop.f32.mrf.mxu0
        %v956 = vadd.f32 %v379, %v955
        %v957 = vpop.f32.mrf.mxu0
        %v958 = vadd.f32 %v383, %v957
        %959 = vmatprep.mubr.bf16.mxu0 0
        %960 = vmatmul.mubr.bf16.gmra.mxu0 %v461
        %v961 = vpop.f32.mrf.mxu0
        %v962 = vadd.f32 %v379, %v961
        %v963 = vpop.f32.mrf.mxu0
        %v964 = vadd.f32 %v383, %v963
        %v965 = vpop.f32.mrf.mxu0
        %v966 = vadd.f32 %v379, %v965
        %v967 = vpop.f32.mrf.mxu0
        %v968 = vadd.f32 %v383, %v967
        %969 = vmatprep.mubr.bf16.mxu0 0
        %970 = vmatmul.mubr.bf16.gmra.mxu0 %v462
        %v971 = vpop.f32.mrf.mxu0
        %v972 = vadd.f32 %v379, %v971
        %v973 = vpop.f32.mrf.mxu0
        %v974 = vadd.f32 %v383, %v973
        %v975 = vpop.f32.mrf.mxu0
        %v976 = vadd.f32 %v379, %v975
        %v977 = vpop.f32.mrf.mxu0
        %v978 = vadd.f32 %v383, %v977
        %979 = vmatprep.mubr.bf16.mxu0 0
        %980 = vmatmul.mubr.bf16.gmra.mxu0 %v463
        %v981 = vpop.f32.mrf.mxu0
        %v982 = vadd.f32 %v379, %v981
        %v983 = vpop.f32.mrf.mxu0
        %v984 = vadd.f32 %v383, %v983
        %v985 = vpop.f32.mrf.mxu0
        %v986 = vadd.f32 %v379, %v985
        %v987 = vpop.f32.mrf.mxu0
        %v988 = vadd.f32 %v383, %v987
        %989 = vmatprep.mubr.bf16.mxu0 0
        %990 = vmatmul.mubr.bf16.gmra.mxu0 %v464
        %v991 = vpop.f32.mrf.mxu0
        %v992 = vadd.f32 %v379, %v991
        %v993 = vpop.f32.mrf.mxu0
        %v994 = vadd.f32 %v383, %v993
        %v995 = vpop.f32.mrf.mxu0
        %v996 = vadd.f32 %v379, %v995
        %v997 = vpop.f32.mrf.mxu0
        %v998 = vadd.f32 %v383, %v997
        %999 = vmatprep.mubr.bf16.mxu0 0
        %1000 = vmatmul.mubr.bf16.gmra.mxu0 %v465
        %v1001 = vpop.f32.mrf.mxu0
        %v1002 = vadd.f32 %v379, %v1001
        %v1003 = vpop.f32.mrf.mxu0
        %v1004 = vadd.f32 %v383, %v1003
        %v1005 = vpop.f32.mrf.mxu0
        %v1006 = vadd.f32 %v379, %v1005
        %v1007 = vpop.f32.mrf.mxu0
        %v1008 = vadd.f32 %v383, %v1007
        %1009 = vmatprep.mubr.bf16.mxu0 0
        %1010 = vmatmul.mubr.bf16.gmra.mxu0 %v466
        %v1011 = vpop.f32.mrf.mxu0
        %v1012 = vadd.f32 %v379, %v1011
        %v1013 = vpop.f32.mrf.mxu0
        %v1014 = vadd.f32 %v383, %v1013
        %v1015 = vpop.f32.mrf.mxu0
        %v1016 = vadd.f32 %v379, %v1015
        %v1017 = vpop.f32.mrf.mxu0
        %v1018 = vadd.f32 %v383, %v1017
        %1019 = vmatprep.mubr.bf16.mxu0 0
        %1020 = vmatmul.mubr.bf16.gmra.mxu0 %v467
        %v1021 = vpop.f32.mrf.mxu0
        %v1022 = vadd.f32 %v379, %v1021
        %v1023 = vpop.f32.mrf.mxu0
        %v1024 = vadd.f32 %v383, %v1023
        %v1025 = vpop.f32.mrf.mxu0
        %v1026 = vadd.f32 %v379, %v1025
        %v1027 = vpop.f32.mrf.mxu0
        %v1028 = vadd.f32 %v383, %v1027
        %1029 = vdwg.mxu0
        %v1030 = vmax.f32 %v679, 0.0
        %v1031 = vmax.f32 %v681, 0.0
        %v1032 = vmax.f32 %v872, 0.0
        %v1033 = vmax.f32 %v874, 0.0
        %v1034 = vmax.f32 %v683, 0.0
        %v1035 = vmax.f32 %v685, 0.0
        %v1036 = vmax.f32 %v876, 0.0
        %v1037 = vmax.f32 %v878, 0.0
        %v1038 = vmax.f32 %v689, 0.0
        %v1039 = vmax.f32 %v691, 0.0
        %v1040 = vmax.f32 %v882, 0.0
        %v1041 = vmax.f32 %v884, 0.0
        %v1042 = vmax.f32 %v693, 0.0
        %v1043 = vmax.f32 %v695, 0.0
        %v1044 = vmax.f32 %v886, 0.0
        %v1045 = vmax.f32 %v888, 0.0
        %v1046 = vmax.f32 %v699, 0.0
        %v1047 = vmax.f32 %v701, 0.0
        %v1048 = vmax.f32 %v892, 0.0
        %v1049 = vmax.f32 %v894, 0.0
        %v1050 = vmax.f32 %v703, 0.0
        %v1051 = vmax.f32 %v705, 0.0
        %v1052 = vmax.f32 %v896, 0.0
        %v1053 = vmax.f32 %v898, 0.0
        %v1054 = vmax.f32 %v709, 0.0
        %v1055 = vmax.f32 %v711, 0.0
        %v1056 = vmax.f32 %v902, 0.0
        %v1057 = vmax.f32 %v904, 0.0
        %v1058 = vmax.f32 %v713, 0.0
        %v1059 = vmax.f32 %v715, 0.0
        %v1060 = vmax.f32 %v906, 0.0
        %v1061 = vmax.f32 %v908, 0.0
        %v1062 = vmax.f32 %v719, 0.0
        %v1063 = vmax.f32 %v721, 0.0
        %v1064 = vmax.f32 %v912, 0.0
        %v1065 = vmax.f32 %v914, 0.0
        %v1066 = vmax.f32 %v723, 0.0
        %v1067 = vmax.f32 %v725, 0.0
        %v1068 = vmax.f32 %v916, 0.0
        %v1069 = vmax.f32 %v918, 0.0
        %v1070 = vmax.f32 %v729, 0.0
        %v1071 = vmax.f32 %v731, 0.0
        %v1072 = vmax.f32 %v922, 0.0
        %v1073 = vmax.f32 %v924, 0.0
        %v1074 = vmax.f32 %v733, 0.0
        %v1075 = vmax.f32 %v735, 0.0
        %v1076 = vmax.f32 %v926, 0.0
        %v1077 = vmax.f32 %v928, 0.0
        %v1078 = vmax.f32 %v739, 0.0
        %v1079 = vmax.f32 %v741, 0.0
        %v1080 = vmax.f32 %v932, 0.0
        %v1081 = vmax.f32 %v934, 0.0
        %v1082 = vmax.f32 %v743, 0.0
        %v1083 = vmax.f32 %v745, 0.0
        %v1084 = vmax.f32 %v936, 0.0
        %v1085 = vmax.f32 %v938, 0.0
        %v1086 = vmax.f32 %v749, 0.0
        %v1087 = vmax.f32 %v751, 0.0
        %v1088 = vmax.f32 %v942, 0.0
        %v1089 = vmax.f32 %v944, 0.0
        %v1090 = vmax.f32 %v753, 0.0
        %v1091 = vmax.f32 %v755, 0.0
        %v1092 = vmax.f32 %v946, 0.0
        %v1093 = vmax.f32 %v948, 0.0
        %v1094 = vmax.f32 %v759, 0.0
        %v1095 = vmax.f32 %v761, 0.0
        %v1096 = vmax.f32 %v952, 0.0
        %v1097 = vmax.f32 %v954, 0.0
        %v1098 = vmax.f32 %v763, 0.0
        %v1099 = vmax.f32 %v765, 0.0
        %v1100 = vmax.f32 %v956, 0.0
        %v1101 = vmax.f32 %v958, 0.0
        %v1102 = vmax.f32 %v769, 0.0
        %v1103 = vmax.f32 %v771, 0.0
        %v1104 = vmax.f32 %v962, 0.0
        %v1105 = vmax.f32 %v964, 0.0
        %v1106 = vmax.f32 %v773, 0.0
        %v1107 = vmax.f32 %v775, 0.0
        %v1108 = vmax.f32 %v966, 0.0
        %v1109 = vmax.f32 %v968, 0.0
        %v1110 = vmax.f32 %v779, 0.0
        %v1111 = vmax.f32 %v781, 0.0
        %v1112 = vmax.f32 %v972, 0.0
        %v1113 = vmax.f32 %v974, 0.0
        %v1114 = vmax.f32 %v783, 0.0
        %v1115 = vmax.f32 %v785, 0.0
        %v1116 = vmax.f32 %v976, 0.0
        %v1117 = vmax.f32 %v978, 0.0
        %v1118 = vmax.f32 %v789, 0.0
        %v1119 = vmax.f32 %v791, 0.0
        %v1120 = vmax.f32 %v982, 0.0
        %v1121 = vmax.f32 %v984, 0.0
        %v1122 = vmax.f32 %v793, 0.0
        %v1123 = vmax.f32 %v795, 0.0
        %v1124 = vmax.f32 %v986, 0.0
        %v1125 = vmax.f32 %v988, 0.0
        %v1126 = vmax.f32 %v799, 0.0
        %v1127 = vmax.f32 %v801, 0.0
        %v1128 = vmax.f32 %v992, 0.0
        %v1129 = vmax.f32 %v994, 0.0
        %v1130 = vmax.f32 %v803, 0.0
        %v1131 = vmax.f32 %v805, 0.0
        %v1132 = vmax.f32 %v996, 0.0
        %v1133 = vmax.f32 %v998, 0.0
        %v1134 = vmax.f32 %v809, 0.0
        %v1135 = vmax.f32 %v811, 0.0
        %v1136 = vmax.f32 %v1002, 0.0
        %v1137 = vmax.f32 %v1004, 0.0
        %v1138 = vmax.f32 %v813, 0.0
        %v1139 = vmax.f32 %v815, 0.0
        %v1140 = vmax.f32 %v1006, 0.0
        %v1141 = vmax.f32 %v1008, 0.0
        %v1142 = vmax.f32 %v819, 0.0
        %v1143 = vmax.f32 %v821, 0.0
        %v1144 = vmax.f32 %v1012, 0.0
        %v1145 = vmax.f32 %v1014, 0.0
        %v1146 = vmax.f32 %v823, 0.0
        %v1147 = vmax.f32 %v825, 0.0
        %v1148 = vmax.f32 %v1016, 0.0
        %v1149 = vmax.f32 %v1018, 0.0
        %v1150 = vmax.f32 %v829, 0.0
        %v1151 = vmax.f32 %v831, 0.0
        %v1152 = vmax.f32 %v1022, 0.0
        %v1153 = vmax.f32 %v1024, 0.0
        %v1154 = vmax.f32 %v833, 0.0
        %v1155 = vmax.f32 %v835, 0.0
        %v1156 = vmax.f32 %v1026, 0.0
        %v1157 = vmax.f32 %v1028, 0.0
        %v1158 = vld [vmem:[#allocation8] sm:$0xff]
        %v1160 = vlaneseq
        %v1161 = vshrl.u32 %v1160, 7
        %v1162 = vsub.s32 0, %v1161
        %v1163 = vrot.slane %v1158, %v1162
        %v1164 = vlaneseq
        %v1165 = vshrl.u32 %v1164, 7
        %v1166 = vsub.s32 2, %v1165
        %v1167 = vrot.slane %v1158, %v1166
        %v1168 = vlaneseq
        %v1169 = vshrl.u32 %v1168, 7
        %v1170 = vsub.s32 4, %v1169
        %v1171 = vrot.slane %v1158, %v1170
        %v1172 = vlaneseq
        %v1173 = vshrl.u32 %v1172, 7
        %v1174 = vsub.s32 6, %v1173
        %v1175 = vrot.slane %v1158, %v1174
        %v1180 = vlaneseq
        %v1181 = vshrl.u32 %v1180, 7
        %v1182 = vsub.s32 0, %v1181
        %v1183 = vrot.slane %v1163, %v1182
        %v1184 = vlaneseq
        %v1185 = vshrl.u32 %v1184, 7
        %v1186 = vsub.s32 0, %v1185
        %v1187 = vrot.slane %v1167, %v1186
        %v1188 = vlaneseq
        %v1189 = vshrl.u32 %v1188, 7
        %v1190 = vsub.s32 0, %v1189
        %v1191 = vrot.slane %v1171, %v1190
        %v1192 = vlaneseq
        %v1193 = vshrl.u32 %v1192, 7
        %v1194 = vsub.s32 0, %v1193
        %v1195 = vrot.slane %v1175, %v1194
        %v1196 = vmul.f32 %v1030, %v1183
        %v1197 = vmul.f32 %v1031, %v1187
        %v1198 = vmul.f32 %v1032, %v1191
        %v1199 = vmul.f32 %v1033, %v1195
        %v1200 = vmul.f32 %v1034, %v1183
        %v1201 = vmul.f32 %v1035, %v1187
        %v1202 = vmul.f32 %v1036, %v1191
        %v1203 = vmul.f32 %v1037, %v1195
        %v1204 = vmul.f32 %v1038, %v1183
        %v1205 = vmul.f32 %v1039, %v1187
        %v1206 = vmul.f32 %v1040, %v1191
        %v1207 = vmul.f32 %v1041, %v1195
        %v1208 = vmul.f32 %v1042, %v1183
        %v1209 = vmul.f32 %v1043, %v1187
        %v1210 = vmul.f32 %v1044, %v1191
        %v1211 = vmul.f32 %v1045, %v1195
        %v1212 = vmul.f32 %v1046, %v1183
        %v1213 = vmul.f32 %v1047, %v1187
        %v1214 = vmul.f32 %v1048, %v1191
        %v1215 = vmul.f32 %v1049, %v1195
        %v1216 = vmul.f32 %v1050, %v1183
        %v1217 = vmul.f32 %v1051, %v1187
        %v1218 = vmul.f32 %v1052, %v1191
        %v1219 = vmul.f32 %v1053, %v1195
        %v1220 = vmul.f32 %v1054, %v1183
        %v1221 = vmul.f32 %v1055, %v1187
        %v1222 = vmul.f32 %v1056, %v1191
        %v1223 = vmul.f32 %v1057, %v1195
        %v1224 = vmul.f32 %v1058, %v1183
        %v1225 = vmul.f32 %v1059, %v1187
        %v1226 = vmul.f32 %v1060, %v1191
        %v1227 = vmul.f32 %v1061, %v1195
        %v1228 = vmul.f32 %v1062, %v1183
        %v1229 = vmul.f32 %v1063, %v1187
        %v1230 = vmul.f32 %v1064, %v1191
        %v1231 = vmul.f32 %v1065, %v1195
        %v1232 = vmul.f32 %v1066, %v1183
        %v1233 = vmul.f32 %v1067, %v1187
        %v1234 = vmul.f32 %v1068, %v1191
        %v1235 = vmul.f32 %v1069, %v1195
        %v1236 = vmul.f32 %v1070, %v1183
        %v1237 = vmul.f32 %v1071, %v1187
        %v1238 = vmul.f32 %v1072, %v1191
        %v1239 = vmul.f32 %v1073, %v1195
        %v1240 = vmul.f32 %v1074, %v1183
        %v1241 = vmul.f32 %v1075, %v1187
        %v1242 = vmul.f32 %v1076, %v1191
        %v1243 = vmul.f32 %v1077, %v1195
        %v1244 = vmul.f32 %v1078, %v1183
        %v1245 = vmul.f32 %v1079, %v1187
        %v1246 = vmul.f32 %v1080, %v1191
        %v1247 = vmul.f32 %v1081, %v1195
        %v1248 = vmul.f32 %v1082, %v1183
        %v1249 = vmul.f32 %v1083, %v1187
        %v1250 = vmul.f32 %v1084, %v1191
        %v1251 = vmul.f32 %v1085, %v1195
        %v1252 = vmul.f32 %v1086, %v1183
        %v1253 = vmul.f32 %v1087, %v1187
        %v1254 = vmul.f32 %v1088, %v1191
        %v1255 = vmul.f32 %v1089, %v1195
        %v1256 = vmul.f32 %v1090, %v1183
        %v1257 = vmul.f32 %v1091, %v1187
        %v1258 = vmul.f32 %v1092, %v1191
        %v1259 = vmul.f32 %v1093, %v1195
        %v1260 = vmul.f32 %v1094, %v1183
        %v1261 = vmul.f32 %v1095, %v1187
        %v1262 = vmul.f32 %v1096, %v1191
        %v1263 = vmul.f32 %v1097, %v1195
        %v1264 = vmul.f32 %v1098, %v1183
        %v1265 = vmul.f32 %v1099, %v1187
        %v1266 = vmul.f32 %v1100, %v1191
        %v1267 = vmul.f32 %v1101, %v1195
        %v1268 = vmul.f32 %v1102, %v1183
        %v1269 = vmul.f32 %v1103, %v1187
        %v1270 = vmul.f32 %v1104, %v1191
        %v1271 = vmul.f32 %v1105, %v1195
        %v1272 = vmul.f32 %v1106, %v1183
        %v1273 = vmul.f32 %v1107, %v1187
        %v1274 = vmul.f32 %v1108, %v1191
        %v1275 = vmul.f32 %v1109, %v1195
        %v1276 = vmul.f32 %v1110, %v1183
        %v1277 = vmul.f32 %v1111, %v1187
        %v1278 = vmul.f32 %v1112, %v1191
        %v1279 = vmul.f32 %v1113, %v1195
        %v1280 = vmul.f32 %v1114, %v1183
        %v1281 = vmul.f32 %v1115, %v1187
        %v1282 = vmul.f32 %v1116, %v1191
        %v1283 = vmul.f32 %v1117, %v1195
        %v1284 = vmul.f32 %v1118, %v1183
        %v1285 = vmul.f32 %v1119, %v1187
        %v1286 = vmul.f32 %v1120, %v1191
        %v1287 = vmul.f32 %v1121, %v1195
        %v1288 = vmul.f32 %v1122, %v1183
        %v1289 = vmul.f32 %v1123, %v1187
        %v1290 = vmul.f32 %v1124, %v1191
        %v1291 = vmul.f32 %v1125, %v1195
        %v1292 = vmul.f32 %v1126, %v1183
        %v1293 = vmul.f32 %v1127, %v1187
        %v1294 = vmul.f32 %v1128, %v1191
        %v1295 = vmul.f32 %v1129, %v1195
        %v1296 = vmul.f32 %v1130, %v1183
        %v1297 = vmul.f32 %v1131, %v1187
        %v1298 = vmul.f32 %v1132, %v1191
        %v1299 = vmul.f32 %v1133, %v1195
        %v1300 = vmul.f32 %v1134, %v1183
        %v1301 = vmul.f32 %v1135, %v1187
        %v1302 = vmul.f32 %v1136, %v1191
        %v1303 = vmul.f32 %v1137, %v1195
        %v1304 = vmul.f32 %v1138, %v1183
        %v1305 = vmul.f32 %v1139, %v1187
        %v1306 = vmul.f32 %v1140, %v1191
        %v1307 = vmul.f32 %v1141, %v1195
        %v1308 = vmul.f32 %v1142, %v1183
        %v1309 = vmul.f32 %v1143, %v1187
        %v1310 = vmul.f32 %v1144, %v1191
        %v1311 = vmul.f32 %v1145, %v1195
        %v1312 = vmul.f32 %v1146, %v1183
        %v1313 = vmul.f32 %v1147, %v1187
        %v1314 = vmul.f32 %v1148, %v1191
        %v1315 = vmul.f32 %v1149, %v1195
        %v1316 = vmul.f32 %v1150, %v1183
        %v1317 = vmul.f32 %v1151, %v1187
        %v1318 = vmul.f32 %v1152, %v1191
        %v1319 = vmul.f32 %v1153, %v1195
        %v1320 = vmul.f32 %v1154, %v1183
        %v1321 = vmul.f32 %v1155, %v1187
        %v1322 = vmul.f32 %v1156, %v1191
        %v1323 = vmul.f32 %v1157, %v1195
        %v1324 = vadd.f32 %v1196, %v1197
        %v1325 = vadd.f32 %v1324, %v1198
        %v1326 = vadd.f32 %v1325, %v1199
        %1327 = vadd.xlane.f32.xlu0 %v1326
        %v1328 = vpop.xlane.xlu0 %1327
        %v1329 = vadd.f32 %v1200, %v1201
        %v1330 = vadd.f32 %v1329, %v1202
        %v1331 = vadd.f32 %v1330, %v1203
        %1332 = vadd.xlane.f32.xlu0 %v1331
        %v1333 = vpop.xlane.xlu0 %1332
        %v1334 = vadd.f32 %v1204, %v1205
        %v1335 = vadd.f32 %v1334, %v1206
        %v1336 = vadd.f32 %v1335, %v1207
        %1337 = vadd.xlane.f32.xlu0 %v1336
        %v1338 = vpop.xlane.xlu0 %1337
        %v1339 = vadd.f32 %v1208, %v1209
        %v1340 = vadd.f32 %v1339, %v1210
        %v1341 = vadd.f32 %v1340, %v1211
        %1342 = vadd.xlane.f32.xlu0 %v1341
        %v1343 = vpop.xlane.xlu0 %1342
        %v1344 = vadd.f32 %v1212, %v1213
        %v1345 = vadd.f32 %v1344, %v1214
        %v1346 = vadd.f32 %v1345, %v1215
        %1347 = vadd.xlane.f32.xlu0 %v1346
        %v1348 = vpop.xlane.xlu0 %1347
        %v1349 = vadd.f32 %v1216, %v1217
        %v1350 = vadd.f32 %v1349, %v1218
        %v1351 = vadd.f32 %v1350, %v1219
        %1352 = vadd.xlane.f32.xlu0 %v1351
        %v1353 = vpop.xlane.xlu0 %1352
        %v1354 = vadd.f32 %v1220, %v1221
        %v1355 = vadd.f32 %v1354, %v1222
        %v1356 = vadd.f32 %v1355, %v1223
        %1357 = vadd.xlane.f32.xlu0 %v1356
        %v1358 = vpop.xlane.xlu0 %1357
        %v1359 = vadd.f32 %v1224, %v1225
        %v1360 = vadd.f32 %v1359, %v1226
        %v1361 = vadd.f32 %v1360, %v1227
        %1362 = vadd.xlane.f32.xlu0 %v1361
        %v1363 = vpop.xlane.xlu0 %1362
        %v1364 = vadd.f32 %v1228, %v1229
        %v1365 = vadd.f32 %v1364, %v1230
        %v1366 = vadd.f32 %v1365, %v1231
        %1367 = vadd.xlane.f32.xlu0 %v1366
        %v1368 = vpop.xlane.xlu0 %1367
        %v1369 = vadd.f32 %v1232, %v1233
        %v1370 = vadd.f32 %v1369, %v1234
        %v1371 = vadd.f32 %v1370, %v1235
        %1372 = vadd.xlane.f32.xlu0 %v1371
        %v1373 = vpop.xlane.xlu0 %1372
        %v1374 = vadd.f32 %v1236, %v1237
        %v1375 = vadd.f32 %v1374, %v1238
        %v1376 = vadd.f32 %v1375, %v1239
        %1377 = vadd.xlane.f32.xlu0 %v1376
        %v1378 = vpop.xlane.xlu0 %1377
        %v1379 = vadd.f32 %v1240, %v1241
        %v1380 = vadd.f32 %v1379, %v1242
        %v1381 = vadd.f32 %v1380, %v1243
        %1382 = vadd.xlane.f32.xlu0 %v1381
        %v1383 = vpop.xlane.xlu0 %1382
        %v1384 = vadd.f32 %v1244, %v1245
        %v1385 = vadd.f32 %v1384, %v1246
        %v1386 = vadd.f32 %v1385, %v1247
        %1387 = vadd.xlane.f32.xlu0 %v1386
        %v1388 = vpop.xlane.xlu0 %1387
        %v1389 = vadd.f32 %v1248, %v1249
        %v1390 = vadd.f32 %v1389, %v1250
        %v1391 = vadd.f32 %v1390, %v1251
        %1392 = vadd.xlane.f32.xlu0 %v1391
        %v1393 = vpop.xlane.xlu0 %1392
        %v1394 = vadd.f32 %v1252, %v1253
        %v1395 = vadd.f32 %v1394, %v1254
        %v1396 = vadd.f32 %v1395, %v1255
        %1397 = vadd.xlane.f32.xlu0 %v1396
        %v1398 = vpop.xlane.xlu0 %1397
        %v1399 = vadd.f32 %v1256, %v1257
        %v1400 = vadd.f32 %v1399, %v1258
        %v1401 = vadd.f32 %v1400, %v1259
        %1402 = vadd.xlane.f32.xlu0 %v1401
        %v1403 = vpop.xlane.xlu0 %1402
        %v1404 = vadd.f32 %v1260, %v1261
        %v1405 = vadd.f32 %v1404, %v1262
        %v1406 = vadd.f32 %v1405, %v1263
        %1407 = vadd.xlane.f32.xlu0 %v1406
        %v1408 = vpop.xlane.xlu0 %1407
        %v1409 = vadd.f32 %v1264, %v1265
        %v1410 = vadd.f32 %v1409, %v1266
        %v1411 = vadd.f32 %v1410, %v1267
        %1412 = vadd.xlane.f32.xlu0 %v1411
        %v1413 = vpop.xlane.xlu0 %1412
        %v1414 = vadd.f32 %v1268, %v1269
        %v1415 = vadd.f32 %v1414, %v1270
        %v1416 = vadd.f32 %v1415, %v1271
        %1417 = vadd.xlane.f32.xlu0 %v1416
        %v1418 = vpop.xlane.xlu0 %1417
        %v1419 = vadd.f32 %v1272, %v1273
        %v1420 = vadd.f32 %v1419, %v1274
        %v1421 = vadd.f32 %v1420, %v1275
        %1422 = vadd.xlane.f32.xlu0 %v1421
        %v1423 = vpop.xlane.xlu0 %1422
        %v1424 = vadd.f32 %v1276, %v1277
        %v1425 = vadd.f32 %v1424, %v1278
        %v1426 = vadd.f32 %v1425, %v1279
        %1427 = vadd.xlane.f32.xlu0 %v1426
        %v1428 = vpop.xlane.xlu0 %1427
        %v1429 = vadd.f32 %v1280, %v1281
        %v1430 = vadd.f32 %v1429, %v1282
        %v1431 = vadd.f32 %v1430, %v1283
        %1432 = vadd.xlane.f32.xlu0 %v1431
        %v1433 = vpop.xlane.xlu0 %1432
        %v1434 = vadd.f32 %v1284, %v1285
        %v1435 = vadd.f32 %v1434, %v1286
        %v1436 = vadd.f32 %v1435, %v1287
        %1437 = vadd.xlane.f32.xlu0 %v1436
        %v1438 = vpop.xlane.xlu0 %1437
        %v1439 = vadd.f32 %v1288, %v1289
        %v1440 = vadd.f32 %v1439, %v1290
        %v1441 = vadd.f32 %v1440, %v1291
        %1442 = vadd.xlane.f32.xlu0 %v1441
        %v1443 = vpop.xlane.xlu0 %1442
        %v1444 = vadd.f32 %v1292, %v1293
        %v1445 = vadd.f32 %v1444, %v1294
        %v1446 = vadd.f32 %v1445, %v1295
        %1447 = vadd.xlane.f32.xlu0 %v1446
        %v1448 = vpop.xlane.xlu0 %1447
        %v1449 = vadd.f32 %v1296, %v1297
        %v1450 = vadd.f32 %v1449, %v1298
        %v1451 = vadd.f32 %v1450, %v1299
        %1452 = vadd.xlane.f32.xlu0 %v1451
        %v1453 = vpop.xlane.xlu0 %1452
        %v1454 = vadd.f32 %v1300, %v1301
        %v1455 = vadd.f32 %v1454, %v1302
        %v1456 = vadd.f32 %v1455, %v1303
        %1457 = vadd.xlane.f32.xlu0 %v1456
        %v1458 = vpop.xlane.xlu0 %1457
        %v1459 = vadd.f32 %v1304, %v1305
        %v1460 = vadd.f32 %v1459, %v1306
        %v1461 = vadd.f32 %v1460, %v1307
        %1462 = vadd.xlane.f32.xlu0 %v1461
        %v1463 = vpop.xlane.xlu0 %1462
        %v1464 = vadd.f32 %v1308, %v1309
        %v1465 = vadd.f32 %v1464, %v1310
        %v1466 = vadd.f32 %v1465, %v1311
        %1467 = vadd.xlane.f32.xlu0 %v1466
        %v1468 = vpop.xlane.xlu0 %1467
        %v1469 = vadd.f32 %v1312, %v1313
        %v1470 = vadd.f32 %v1469, %v1314
        %v1471 = vadd.f32 %v1470, %v1315
        %1472 = vadd.xlane.f32.xlu0 %v1471
        %v1473 = vpop.xlane.xlu0 %1472
        %v1474 = vadd.f32 %v1316, %v1317
        %v1475 = vadd.f32 %v1474, %v1318
        %v1476 = vadd.f32 %v1475, %v1319
        %1477 = vadd.xlane.f32.xlu0 %v1476
        %v1478 = vpop.xlane.xlu0 %1477
        %v1479 = vadd.f32 %v1320, %v1321
        %v1480 = vadd.f32 %v1479, %v1322
        %v1481 = vadd.f32 %v1480, %v1323
        %1482 = vadd.xlane.f32.xlu0 %v1481
        %v1483 = vpop.xlane.xlu0 %1482
        %s1484 = sld [smem:[#allocation10]]
        %v1485 = vstv %s1484
        %v1486 = vadd.f32 %v1328, %v1485
        %v1487 = vadd.f32 %v1333, %v1485
        %v1488 = vadd.f32 %v1338, %v1485
        %v1489 = vadd.f32 %v1343, %v1485
        %v1490 = vadd.f32 %v1348, %v1485
        %v1491 = vadd.f32 %v1353, %v1485
        %v1492 = vadd.f32 %v1358, %v1485
        %v1493 = vadd.f32 %v1363, %v1485
        %v1494 = vadd.f32 %v1368, %v1485
        %v1495 = vadd.f32 %v1373, %v1485
        %v1496 = vadd.f32 %v1378, %v1485
        %v1497 = vadd.f32 %v1383, %v1485
        %v1498 = vadd.f32 %v1388, %v1485
        %v1499 = vadd.f32 %v1393, %v1485
        %v1500 = vadd.f32 %v1398, %v1485
        %v1501 = vadd.f32 %v1403, %v1485
        %v1502 = vadd.f32 %v1408, %v1485
        %v1503 = vadd.f32 %v1413, %v1485
        %v1504 = vadd.f32 %v1418, %v1485
        %v1505 = vadd.f32 %v1423, %v1485
        %v1506 = vadd.f32 %v1428, %v1485
        %v1507 = vadd.f32 %v1433, %v1485
        %v1508 = vadd.f32 %v1438, %v1485
        %v1509 = vadd.f32 %v1443, %v1485
        %v1510 = vadd.f32 %v1448, %v1485
        %v1511 = vadd.f32 %v1453, %v1485
        %v1512 = vadd.f32 %v1458, %v1485
        %v1513 = vadd.f32 %v1463, %v1485
        %v1514 = vadd.f32 %v1468, %v1485
        %v1515 = vadd.f32 %v1473, %v1485
        %v1516 = vadd.f32 %v1478, %v1485
        %v1517 = vadd.f32 %v1483, %v1485
        %v1518 = vlaneseq
        %v1519 = vshrl.u32 %v1518, 7
        %v1520 = vsub.s32 1, %v1519
        %v1521 = vrot.slane %v1158, %v1520
        %v1522 = vlaneseq
        %v1523 = vshrl.u32 %v1522, 7
        %v1524 = vsub.s32 3, %v1523
        %v1525 = vrot.slane %v1158, %v1524
        %v1526 = vlaneseq
        %v1527 = vshrl.u32 %v1526, 7
        %v1528 = vsub.s32 5, %v1527
        %v1529 = vrot.slane %v1158, %v1528
        %v1530 = vlaneseq
        %v1531 = vshrl.u32 %v1530, 7
        %v1532 = vsub.s32 7, %v1531
        %v1533 = vrot.slane %v1158, %v1532
        %v1538 = vlaneseq
        %v1539 = vshrl.u32 %v1538, 7
        %v1540 = vsub.s32 1, %v1539
        %v1541 = vrot.slane %v1521, %v1540
        %v1542 = vlaneseq
        %v1543 = vshrl.u32 %v1542, 7
        %v1544 = vsub.s32 1, %v1543
        %v1545 = vrot.slane %v1525, %v1544
        %v1546 = vlaneseq
        %v1547 = vshrl.u32 %v1546, 7
        %v1548 = vsub.s32 1, %v1547
        %v1549 = vrot.slane %v1529, %v1548
        %v1550 = vlaneseq
        %v1551 = vshrl.u32 %v1550, 7
        %v1552 = vsub.s32 1, %v1551
        %v1553 = vrot.slane %v1533, %v1552
        %v1554 = vmul.f32 %v1030, %v1541
        %v1555 = vmul.f32 %v1031, %v1545
        %v1556 = vmul.f32 %v1032, %v1549
        %v1557 = vmul.f32 %v1033, %v1553
        %v1558 = vmul.f32 %v1034, %v1541
        %v1559 = vmul.f32 %v1035, %v1545
        %v1560 = vmul.f32 %v1036, %v1549
        %v1561 = vmul.f32 %v1037, %v1553
        %v1562 = vmul.f32 %v1038, %v1541
        %v1563 = vmul.f32 %v1039, %v1545
        %v1564 = vmul.f32 %v1040, %v1549
        %v1565 = vmul.f32 %v1041, %v1553
        %v1566 = vmul.f32 %v1042, %v1541
        %v1567 = vmul.f32 %v1043, %v1545
        %v1568 = vmul.f32 %v1044, %v1549
        %v1569 = vmul.f32 %v1045, %v1553
        %v1570 = vmul.f32 %v1046, %v1541
        %v1571 = vmul.f32 %v1047, %v1545
        %v1572 = vmul.f32 %v1048, %v1549
        %v1573 = vmul.f32 %v1049, %v1553
        %v1574 = vmul.f32 %v1050, %v1541
        %v1575 = vmul.f32 %v1051, %v1545
        %v1576 = vmul.f32 %v1052, %v1549
        %v1577 = vmul.f32 %v1053, %v1553
        %v1578 = vmul.f32 %v1054, %v1541
        %v1579 = vmul.f32 %v1055, %v1545
        %v1580 = vmul.f32 %v1056, %v1549
        %v1581 = vmul.f32 %v1057, %v1553
        %v1582 = vmul.f32 %v1058, %v1541
        %v1583 = vmul.f32 %v1059, %v1545
        %v1584 = vmul.f32 %v1060, %v1549
        %v1585 = vmul.f32 %v1061, %v1553
        %v1586 = vmul.f32 %v1062, %v1541
        %v1587 = vmul.f32 %v1063, %v1545
        %v1588 = vmul.f32 %v1064, %v1549
        %v1589 = vmul.f32 %v1065, %v1553
        %v1590 = vmul.f32 %v1066, %v1541
        %v1591 = vmul.f32 %v1067, %v1545
        %v1592 = vmul.f32 %v1068, %v1549
        %v1593 = vmul.f32 %v1069, %v1553
        %v1594 = vmul.f32 %v1070, %v1541
        %v1595 = vmul.f32 %v1071, %v1545
        %v1596 = vmul.f32 %v1072, %v1549
        %v1597 = vmul.f32 %v1073, %v1553
        %v1598 = vmul.f32 %v1074, %v1541
        %v1599 = vmul.f32 %v1075, %v1545
        %v1600 = vmul.f32 %v1076, %v1549
        %v1601 = vmul.f32 %v1077, %v1553
        %v1602 = vmul.f32 %v1078, %v1541
        %v1603 = vmul.f32 %v1079, %v1545
        %v1604 = vmul.f32 %v1080, %v1549
        %v1605 = vmul.f32 %v1081, %v1553
        %v1606 = vmul.f32 %v1082, %v1541
        %v1607 = vmul.f32 %v1083, %v1545
        %v1608 = vmul.f32 %v1084, %v1549
        %v1609 = vmul.f32 %v1085, %v1553
        %v1610 = vmul.f32 %v1086, %v1541
        %v1611 = vmul.f32 %v1087, %v1545
        %v1612 = vmul.f32 %v1088, %v1549
        %v1613 = vmul.f32 %v1089, %v1553
        %v1614 = vmul.f32 %v1090, %v1541
        %v1615 = vmul.f32 %v1091, %v1545
        %v1616 = vmul.f32 %v1092, %v1549
        %v1617 = vmul.f32 %v1093, %v1553
        %v1618 = vmul.f32 %v1094, %v1541
        %v1619 = vmul.f32 %v1095, %v1545
        %v1620 = vmul.f32 %v1096, %v1549
        %v1621 = vmul.f32 %v1097, %v1553
        %v1622 = vmul.f32 %v1098, %v1541
        %v1623 = vmul.f32 %v1099, %v1545
        %v1624 = vmul.f32 %v1100, %v1549
        %v1625 = vmul.f32 %v1101, %v1553
        %v1626 = vmul.f32 %v1102, %v1541
        %v1627 = vmul.f32 %v1103, %v1545
        %v1628 = vmul.f32 %v1104, %v1549
        %v1629 = vmul.f32 %v1105, %v1553
        %v1630 = vmul.f32 %v1106, %v1541
        %v1631 = vmul.f32 %v1107, %v1545
        %v1632 = vmul.f32 %v1108, %v1549
        %v1633 = vmul.f32 %v1109, %v1553
        %v1634 = vmul.f32 %v1110, %v1541
        %v1635 = vmul.f32 %v1111, %v1545
        %v1636 = vmul.f32 %v1112, %v1549
        %v1637 = vmul.f32 %v1113, %v1553
        %v1638 = vmul.f32 %v1114, %v1541
        %v1639 = vmul.f32 %v1115, %v1545
        %v1640 = vmul.f32 %v1116, %v1549
        %v1641 = vmul.f32 %v1117, %v1553
        %v1642 = vmul.f32 %v1118, %v1541
        %v1643 = vmul.f32 %v1119, %v1545
        %v1644 = vmul.f32 %v1120, %v1549
        %v1645 = vmul.f32 %v1121, %v1553
        %v1646 = vmul.f32 %v1122, %v1541
        %v1647 = vmul.f32 %v1123, %v1545
        %v1648 = vmul.f32 %v1124, %v1549
        %v1649 = vmul.f32 %v1125, %v1553
        %v1650 = vmul.f32 %v1126, %v1541
        %v1651 = vmul.f32 %v1127, %v1545
        %v1652 = vmul.f32 %v1128, %v1549
        %v1653 = vmul.f32 %v1129, %v1553
        %v1654 = vmul.f32 %v1130, %v1541
        %v1655 = vmul.f32 %v1131, %v1545
        %v1656 = vmul.f32 %v1132, %v1549
        %v1657 = vmul.f32 %v1133, %v1553
        %v1658 = vmul.f32 %v1134, %v1541
        %v1659 = vmul.f32 %v1135, %v1545
        %v1660 = vmul.f32 %v1136, %v1549
        %v1661 = vmul.f32 %v1137, %v1553
        %v1662 = vmul.f32 %v1138, %v1541
        %v1663 = vmul.f32 %v1139, %v1545
        %v1664 = vmul.f32 %v1140, %v1549
        %v1665 = vmul.f32 %v1141, %v1553
        %v1666 = vmul.f32 %v1142, %v1541
        %v1667 = vmul.f32 %v1143, %v1545
        %v1668 = vmul.f32 %v1144, %v1549
        %v1669 = vmul.f32 %v1145, %v1553
        %v1670 = vmul.f32 %v1146, %v1541
        %v1671 = vmul.f32 %v1147, %v1545
        %v1672 = vmul.f32 %v1148, %v1549
        %v1673 = vmul.f32 %v1149, %v1553
        %v1674 = vmul.f32 %v1150, %v1541
        %v1675 = vmul.f32 %v1151, %v1545
        %v1676 = vmul.f32 %v1152, %v1549
        %v1677 = vmul.f32 %v1153, %v1553
        %v1678 = vmul.f32 %v1154, %v1541
        %v1679 = vmul.f32 %v1155, %v1545
        %v1680 = vmul.f32 %v1156, %v1549
        %v1681 = vmul.f32 %v1157, %v1553
        %v1682 = vadd.f32 %v1554, %v1555
        %v1683 = vadd.f32 %v1682, %v1556
        %v1684 = vadd.f32 %v1683, %v1557
        %1685 = vadd.xlane.f32.xlu0 %v1684
        %v1686 = vpop.xlane.xlu0 %1685
        %v1687 = vadd.f32 %v1558, %v1559
        %v1688 = vadd.f32 %v1687, %v1560
        %v1689 = vadd.f32 %v1688, %v1561
        %1690 = vadd.xlane.f32.xlu0 %v1689
        %v1691 = vpop.xlane.xlu0 %1690
        %v1692 = vadd.f32 %v1562, %v1563
        %v1693 = vadd.f32 %v1692, %v1564
        %v1694 = vadd.f32 %v1693, %v1565
        %1695 = vadd.xlane.f32.xlu0 %v1694
        %v1696 = vpop.xlane.xlu0 %1695
        %v1697 = vadd.f32 %v1566, %v1567
        %v1698 = vadd.f32 %v1697, %v1568
        %v1699 = vadd.f32 %v1698, %v1569
        %1700 = vadd.xlane.f32.xlu0 %v1699
        %v1701 = vpop.xlane.xlu0 %1700
        %v1702 = vadd.f32 %v1570, %v1571
        %v1703 = vadd.f32 %v1702, %v1572
        %v1704 = vadd.f32 %v1703, %v1573
        %1705 = vadd.xlane.f32.xlu0 %v1704
        %v1706 = vpop.xlane.xlu0 %1705
        %v1707 = vadd.f32 %v1574, %v1575
        %v1708 = vadd.f32 %v1707, %v1576
        %v1709 = vadd.f32 %v1708, %v1577
        %1710 = vadd.xlane.f32.xlu0 %v1709
        %v1711 = vpop.xlane.xlu0 %1710
        %v1712 = vadd.f32 %v1578, %v1579
        %v1713 = vadd.f32 %v1712, %v1580
        %v1714 = vadd.f32 %v1713, %v1581
        %1715 = vadd.xlane.f32.xlu0 %v1714
        %v1716 = vpop.xlane.xlu0 %1715
        %v1717 = vadd.f32 %v1582, %v1583
        %v1718 = vadd.f32 %v1717, %v1584
        %v1719 = vadd.f32 %v1718, %v1585
        %1720 = vadd.xlane.f32.xlu0 %v1719
        %v1721 = vpop.xlane.xlu0 %1720
        %v1722 = vadd.f32 %v1586, %v1587
        %v1723 = vadd.f32 %v1722, %v1588
        %v1724 = vadd.f32 %v1723, %v1589
        %1725 = vadd.xlane.f32.xlu0 %v1724
        %v1726 = vpop.xlane.xlu0 %1725
        %v1727 = vadd.f32 %v1590, %v1591
        %v1728 = vadd.f32 %v1727, %v1592
        %v1729 = vadd.f32 %v1728, %v1593
        %1730 = vadd.xlane.f32.xlu0 %v1729
        %v1731 = vpop.xlane.xlu0 %1730
        %v1732 = vadd.f32 %v1594, %v1595
        %v1733 = vadd.f32 %v1732, %v1596
        %v1734 = vadd.f32 %v1733, %v1597
        %1735 = vadd.xlane.f32.xlu0 %v1734
        %v1736 = vpop.xlane.xlu0 %1735
        %v1737 = vadd.f32 %v1598, %v1599
        %v1738 = vadd.f32 %v1737, %v1600
        %v1739 = vadd.f32 %v1738, %v1601
        %1740 = vadd.xlane.f32.xlu0 %v1739
        %v1741 = vpop.xlane.xlu0 %1740
        %v1742 = vadd.f32 %v1602, %v1603
        %v1743 = vadd.f32 %v1742, %v1604
        %v1744 = vadd.f32 %v1743, %v1605
        %1745 = vadd.xlane.f32.xlu0 %v1744
        %v1746 = vpop.xlane.xlu0 %1745
        %v1747 = vadd.f32 %v1606, %v1607
        %v1748 = vadd.f32 %v1747, %v1608
        %v1749 = vadd.f32 %v1748, %v1609
        %1750 = vadd.xlane.f32.xlu0 %v1749
        %v1751 = vpop.xlane.xlu0 %1750
        %v1752 = vadd.f32 %v1610, %v1611
        %v1753 = vadd.f32 %v1752, %v1612
        %v1754 = vadd.f32 %v1753, %v1613
        %1755 = vadd.xlane.f32.xlu0 %v1754
        %v1756 = vpop.xlane.xlu0 %1755
        %v1757 = vadd.f32 %v1614, %v1615
        %v1758 = vadd.f32 %v1757, %v1616
        %v1759 = vadd.f32 %v1758, %v1617
        %1760 = vadd.xlane.f32.xlu0 %v1759
        %v1761 = vpop.xlane.xlu0 %1760
        %v1762 = vadd.f32 %v1618, %v1619
        %v1763 = vadd.f32 %v1762, %v1620
        %v1764 = vadd.f32 %v1763, %v1621
        %1765 = vadd.xlane.f32.xlu0 %v1764
        %v1766 = vpop.xlane.xlu0 %1765
        %v1767 = vadd.f32 %v1622, %v1623
        %v1768 = vadd.f32 %v1767, %v1624
        %v1769 = vadd.f32 %v1768, %v1625
        %1770 = vadd.xlane.f32.xlu0 %v1769
        %v1771 = vpop.xlane.xlu0 %1770
        %v1772 = vadd.f32 %v1626, %v1627
        %v1773 = vadd.f32 %v1772, %v1628
        %v1774 = vadd.f32 %v1773, %v1629
        %1775 = vadd.xlane.f32.xlu0 %v1774
        %v1776 = vpop.xlane.xlu0 %1775
        %v1777 = vadd.f32 %v1630, %v1631
        %v1778 = vadd.f32 %v1777, %v1632
        %v1779 = vadd.f32 %v1778, %v1633
        %1780 = vadd.xlane.f32.xlu0 %v1779
        %v1781 = vpop.xlane.xlu0 %1780
        %v1782 = vadd.f32 %v1634, %v1635
        %v1783 = vadd.f32 %v1782, %v1636
        %v1784 = vadd.f32 %v1783, %v1637
        %1785 = vadd.xlane.f32.xlu0 %v1784
        %v1786 = vpop.xlane.xlu0 %1785
        %v1787 = vadd.f32 %v1638, %v1639
        %v1788 = vadd.f32 %v1787, %v1640
        %v1789 = vadd.f32 %v1788, %v1641
        %1790 = vadd.xlane.f32.xlu0 %v1789
        %v1791 = vpop.xlane.xlu0 %1790
        %v1792 = vadd.f32 %v1642, %v1643
        %v1793 = vadd.f32 %v1792, %v1644
        %v1794 = vadd.f32 %v1793, %v1645
        %1795 = vadd.xlane.f32.xlu0 %v1794
        %v1796 = vpop.xlane.xlu0 %1795
        %v1797 = vadd.f32 %v1646, %v1647
        %v1798 = vadd.f32 %v1797, %v1648
        %v1799 = vadd.f32 %v1798, %v1649
        %1800 = vadd.xlane.f32.xlu0 %v1799
        %v1801 = vpop.xlane.xlu0 %1800
        %v1802 = vadd.f32 %v1650, %v1651
        %v1803 = vadd.f32 %v1802, %v1652
        %v1804 = vadd.f32 %v1803, %v1653
        %1805 = vadd.xlane.f32.xlu0 %v1804
        %v1806 = vpop.xlane.xlu0 %1805
        %v1807 = vadd.f32 %v1654, %v1655
        %v1808 = vadd.f32 %v1807, %v1656
        %v1809 = vadd.f32 %v1808, %v1657
        %1810 = vadd.xlane.f32.xlu0 %v1809
        %v1811 = vpop.xlane.xlu0 %1810
        %v1812 = vadd.f32 %v1658, %v1659
        %v1813 = vadd.f32 %v1812, %v1660
        %v1814 = vadd.f32 %v1813, %v1661
        %1815 = vadd.xlane.f32.xlu0 %v1814
        %v1816 = vpop.xlane.xlu0 %1815
        %v1817 = vadd.f32 %v1662, %v1663
        %v1818 = vadd.f32 %v1817, %v1664
        %v1819 = vadd.f32 %v1818, %v1665
        %1820 = vadd.xlane.f32.xlu0 %v1819
        %v1821 = vpop.xlane.xlu0 %1820
        %v1822 = vadd.f32 %v1666, %v1667
        %v1823 = vadd.f32 %v1822, %v1668
        %v1824 = vadd.f32 %v1823, %v1669
        %1825 = vadd.xlane.f32.xlu0 %v1824
        %v1826 = vpop.xlane.xlu0 %1825
        %v1827 = vadd.f32 %v1670, %v1671
        %v1828 = vadd.f32 %v1827, %v1672
        %v1829 = vadd.f32 %v1828, %v1673
        %1830 = vadd.xlane.f32.xlu0 %v1829
        %v1831 = vpop.xlane.xlu0 %1830
        %v1832 = vadd.f32 %v1674, %v1675
        %v1833 = vadd.f32 %v1832, %v1676
        %v1834 = vadd.f32 %v1833, %v1677
        %1835 = vadd.xlane.f32.xlu0 %v1834
        %v1836 = vpop.xlane.xlu0 %1835
        %v1837 = vadd.f32 %v1678, %v1679
        %v1838 = vadd.f32 %v1837, %v1680
        %v1839 = vadd.f32 %v1838, %v1681
        %1840 = vadd.xlane.f32.xlu0 %v1839
        %v1841 = vpop.xlane.xlu0 %1840
        %s1842 = sld [smem:[#allocation10 + $0x1]]
        %v1843 = vstv %s1842
        %v1844 = vadd.f32 %v1686, %v1843
        %v1845 = vadd.f32 %v1691, %v1843
        %v1846 = vadd.f32 %v1696, %v1843
        %v1847 = vadd.f32 %v1701, %v1843
        %v1848 = vadd.f32 %v1706, %v1843
        %v1849 = vadd.f32 %v1711, %v1843
        %v1850 = vadd.f32 %v1716, %v1843
        %v1851 = vadd.f32 %v1721, %v1843
        %v1852 = vadd.f32 %v1726, %v1843
        %v1853 = vadd.f32 %v1731, %v1843
        %v1854 = vadd.f32 %v1736, %v1843
        %v1855 = vadd.f32 %v1741, %v1843
        %v1856 = vadd.f32 %v1746, %v1843
        %v1857 = vadd.f32 %v1751, %v1843
        %v1858 = vadd.f32 %v1756, %v1843
        %v1859 = vadd.f32 %v1761, %v1843
        %v1860 = vadd.f32 %v1766, %v1843
        %v1861 = vadd.f32 %v1771, %v1843
        %v1862 = vadd.f32 %v1776, %v1843
        %v1863 = vadd.f32 %v1781, %v1843
        %v1864 = vadd.f32 %v1786, %v1843
        %v1865 = vadd.f32 %v1791, %v1843
        %v1866 = vadd.f32 %v1796, %v1843
        %v1867 = vadd.f32 %v1801, %v1843
        %v1868 = vadd.f32 %v1806, %v1843
        %v1869 = vadd.f32 %v1811, %v1843
        %v1870 = vadd.f32 %v1816, %v1843
        %v1871 = vadd.f32 %v1821, %v1843
        %v1872 = vadd.f32 %v1826, %v1843
        %v1873 = vadd.f32 %v1831, %v1843
        %v1874 = vadd.f32 %v1836, %v1843
        %v1875 = vadd.f32 %v1841, %v1843
        %vm1876 = vcmask 7168
        %v1877 = vsel %vm1876, %v1486, %v1844
        %v1878 = vsel %vm1876, %v1487, %v1845
        %v1879 = vsel %vm1876, %v1488, %v1846
        %v1880 = vsel %vm1876, %v1489, %v1847
        %v1881 = vsel %vm1876, %v1490, %v1848
        %v1882 = vsel %vm1876, %v1491, %v1849
        %v1883 = vsel %vm1876, %v1492, %v1850
        %v1884 = vsel %vm1876, %v1493, %v1851
        %v1885 = vsel %vm1876, %v1494, %v1852
        %v1886 = vsel %vm1876, %v1495, %v1853
        %v1887 = vsel %vm1876, %v1496, %v1854
        %v1888 = vsel %vm1876, %v1497, %v1855
        %v1889 = vsel %vm1876, %v1498, %v1856
        %v1890 = vsel %vm1876, %v1499, %v1857
        %v1891 = vsel %vm1876, %v1500, %v1858
        %v1892 = vsel %vm1876, %v1501, %v1859
        %v1893 = vsel %vm1876, %v1502, %v1860
        %v1894 = vsel %vm1876, %v1503, %v1861
        %v1895 = vsel %vm1876, %v1504, %v1862
        %v1896 = vsel %vm1876, %v1505, %v1863
        %v1897 = vsel %vm1876, %v1506, %v1864
        %v1898 = vsel %vm1876, %v1507, %v1865
        %v1899 = vsel %vm1876, %v1508, %v1866
        %v1900 = vsel %vm1876, %v1509, %v1867
        %v1901 = vsel %vm1876, %v1510, %v1868
        %v1902 = vsel %vm1876, %v1511, %v1869
        %v1903 = vsel %vm1876, %v1512, %v1870
        %v1904 = vsel %vm1876, %v1513, %v1871
        %v1905 = vsel %vm1876, %v1514, %v1872
        %v1906 = vsel %vm1876, %v1515, %v1873
        %v1907 = vsel %vm1876, %v1516, %v1874
        %v1908 = vsel %vm1876, %v1517, %v1875
        %vm1909 = vcmask 15360
        %1910 = vst.msk [vmem:[%s299] sm:$0xff] %vm1909, %v1877
        %1911 = vst.msk [vmem:[%s299 + $0x8] sm:$0xff] %vm1909, %v1878
        %1912 = vst.msk [vmem:[%s299 + $0x10] sm:$0xff] %vm1909, %v1879
        %1913 = vst.msk [vmem:[%s299 + $0x18] sm:$0xff] %vm1909, %v1880
        %1914 = vst.msk [vmem:[%s299 + $0x20] sm:$0xff] %vm1909, %v1881
        %1915 = vst.msk [vmem:[%s299 + $0x28] sm:$0xff] %vm1909, %v1882
        %1916 = vst.msk [vmem:[%s299 + $0x30] sm:$0xff] %vm1909, %v1883
        %1917 = vst.msk [vmem:[%s299 + $0x38] sm:$0xff] %vm1909, %v1884
        %1918 = vst.msk [vmem:[%s299 + $0x40] sm:$0xff] %vm1909, %v1885
        %1919 = vst.msk [vmem:[%s299 + $0x48] sm:$0xff] %vm1909, %v1886
        %1920 = vst.msk [vmem:[%s299 + $0x50] sm:$0xff] %vm1909, %v1887
        %1921 = vst.msk [vmem:[%s299 + $0x58] sm:$0xff] %vm1909, %v1888
        %1922 = vst.msk [vmem:[%s299 + $0x60] sm:$0xff] %vm1909, %v1889
        %1923 = vst.msk [vmem:[%s299 + $0x68] sm:$0xff] %vm1909, %v1890
        %1924 = vst.msk [vmem:[%s299 + $0x70] sm:$0xff] %vm1909, %v1891
        %1925 = vst.msk [vmem:[%s299 + $0x78] sm:$0xff] %vm1909, %v1892
        %1926 = vst.msk [vmem:[%s299 + $0x80] sm:$0xff] %vm1909, %v1893
        %1927 = vst.msk [vmem:[%s299 + $0x88] sm:$0xff] %vm1909, %v1894
        %1928 = vst.msk [vmem:[%s299 + $0x90] sm:$0xff] %vm1909, %v1895
        %1929 = vst.msk [vmem:[%s299 + $0x98] sm:$0xff] %vm1909, %v1896
        %1930 = vst.msk [vmem:[%s299 + $0xa0] sm:$0xff] %vm1909, %v1897
        %1931 = vst.msk [vmem:[%s299 + $0xa8] sm:$0xff] %vm1909, %v1898
        %1932 = vst.msk [vmem:[%s299 + $0xb0] sm:$0xff] %vm1909, %v1899
        %1933 = vst.msk [vmem:[%s299 + $0xb8] sm:$0xff] %vm1909, %v1900
        %1934 = vst.msk [vmem:[%s299 + $0xc0] sm:$0xff] %vm1909, %v1901
        %1935 = vst.msk [vmem:[%s299 + $0xc8] sm:$0xff] %vm1909, %v1902
        %1936 = vst.msk [vmem:[%s299 + $0xd0] sm:$0xff] %vm1909, %v1903
        %1937 = vst.msk [vmem:[%s299 + $0xd8] sm:$0xff] %vm1909, %v1904
        %1938 = vst.msk [vmem:[%s299 + $0xe0] sm:$0xff] %vm1909, %v1905
        %1939 = vst.msk [vmem:[%s299 + $0xe8] sm:$0xff] %vm1909, %v1906
        %1940 = vst.msk [vmem:[%s299 + $0xf0] sm:$0xff] %vm1909, %v1907
        %1941 = vst.msk [vmem:[%s299 + $0xf8] sm:$0xff] %vm1909, %v1908
        %s1942 = smul.u32 32, %s22
        %p1943 = scmp.lt.s32.totalorder %s1942, 63
        %s1944 = scalar_select %p1943, %s1942, 63
        %s1945 = smul.addr %s1944, 8
        %s1946 = scalar_lea.vmem %s5, %s1945
        // Predicated region
        $region61: #{tpu_custom_call.1} parent=39 // pred_check
          %p1947 = pneg %p150
        $region62: #{tpu_custom_call.1} parent=39 // pred_check_branch
          %1949 = sbr.rel (%p1947) target = $region64
        $region63: #{tpu_custom_call.1} parent=39 // pred_region
          %s1950 = smul.u32 32, %s22
        $region64: #{tpu_custom_call.1} parent=39 // pred_fallthru
          _
      $region40: #{tpu_custom_call.1} parent=5 // pred_fallthru
        _
      %p1951 = scmp.le.s32.totalorder 2, %s17
      // Predicated region
      $region65: #{tpu_custom_call.1} parent=5 // pred_check
        %p1952 = pneg %p1951
      $region66: #{tpu_custom_call.1} parent=5 // pred_check_branch
        %1954 = sbr.rel (%p1952) target = $region68
      $region67: #{tpu_custom_call.1} parent=5 // pred_region
        %s1955 = ssub.s32 %s17, 2
        // Predicated region
        $region69: #{tpu_custom_call.1} parent=67 // pred_check
          %p1956 = pneg %p156
        $region70: #{tpu_custom_call.1} parent=67 // pred_check_branch
          %1958 = sbr.rel (%p1956) target = $region72
        $region71: #{tpu_custom_call.1} parent=67 // pred_region
          %s1959 = smul.u32 32, %s23
          %p1960 = scmp.lt.s32.totalorder %s1959, 63
          %s1961 = scalar_select %p1960, %s1959, 63
          %s1962 = smul.addr %s1961, 8
          %s1963 = scalar_lea.vmem %s5, %s1962
        $region72: #{tpu_custom_call.1} parent=67 // pred_fallthru
          _
      $region68: #{tpu_custom_call.1} parent=5 // pred_fallthru
        _
    $region6: #{tpu_custom_call.1} parent=1 // loop_footer
      %s21 = sadd.s32 1, %s17
    $region7: #{tpu_custom_call.1} parent=1 // loop_footer_branch
      %16 = sbr.rel target = $region3
    $region8: #{tpu_custom_call.1} parent=1 // loop_exit
      _
    %1964 = vsyncpa [#allocation3], 1
    %s1965 = scalar_lea.sflag [#allocation3], 1
    %1966 = vsyncpa %s1965, 1
    %1967 = vsyncpa [#allocation6], 1
    %1968 = vsyncpa [#allocation9], 1
    %1969 = vsyncpa [#allocation4], 1
    %s1970 = scalar_lea.sflag [#allocation4], 1
    %1971 = vsyncpa %s1970, 1

</llo_original>
